<compile_context>
chip_gen: v6e
topology: v6e:2x2x1
jax: 0.10.0
libtpu: 0.0.40
codegen_flags: <defaults>
</compile_context>

<pallas_src>
import jax
import jax.numpy as jnp
from jax.experimental import pallas as pl
from jax.experimental.pallas import tpu as pltpu

INPUT_SIZE = 75
HIDDEN_UNITS = 512
NUM_CLASSES = 10
LEAKY_SLOPE = 0.01          # PyTorch nn.LeakyReLU default negative_slope

PAD_IN = 128                # 75 -> 128 (lane-aligned K for layer 1)
PAD_OUT = 128               # 10 -> 128 (lane-dense output tile)


def _leaky_relu(h):
    return jnp.where(h > 0, h, LEAKY_SLOPE * h)


def _round_up(n, m):
    return ((n + m - 1) // m) * m


def mlp_kernel(x_ref,
               w1_ref, b1_ref,
               w2_ref, b2_ref,
               w3_ref, b3_ref,
               w4_ref, b4_ref,
               o_ref):
    # Layer 1: Linear(128(pad 75) -> 512) + LeakyReLU   (bf16 matmul, f32 accumulate)
    h = jnp.dot(x_ref[...], w1_ref[...], preferred_element_type=jnp.float32)
    h = _leaky_relu(h + b1_ref[...])                      # bias + activation in f32
    # Layer 2: Linear(512 -> 512) + LeakyReLU
    h = jnp.dot(h.astype(jnp.bfloat16), w2_ref[...], preferred_element_type=jnp.float32)
    h = _leaky_relu(h + b2_ref[...])
    # Layer 3: Linear(512 -> 512) + LeakyReLU
    h = jnp.dot(h.astype(jnp.bfloat16), w3_ref[...], preferred_element_type=jnp.float32)
    h = _leaky_relu(h + b3_ref[...])
    # Output layer: Linear(512 -> 128(pad 10)), no activation
    out = jnp.dot(h.astype(jnp.bfloat16), w4_ref[...], preferred_element_type=jnp.float32)
    o_ref[...] = (out + b4_ref[...]).astype(o_ref.dtype)


def mlp_forward(x, params):
    """x: [B, 75] float32; params: (w1,b1,w2,b2,w3,b3,w4,b4) float32, weights stored [in, out]."""
    w1, b1, w2, b2, w3, b3, w4, b4 = params
    B = x.shape[0]

    # Batch tile: multiple of 256 for large B (fills 256-wide MXU, amortizes grid
    # overhead); for small B use one lane-/sublane-aligned tile.
    TB = 512 if B >= 512 else _round_up(B, 16)
    B_pad = _round_up(B, TB)
    grid = (B_pad // TB,)

    # Pad + cast matmul inputs to bf16 (zero-padded rows/cols contribute nothing).
    x_p = jnp.zeros((B_pad, PAD_IN), jnp.bfloat16).at[:B, :INPUT_SIZE].set(
        x.astype(jnp.bfloat16))
    w1_p = jnp.zeros((PAD_IN, HIDDEN_UNITS), jnp.bfloat16).at[:INPUT_SIZE, :].set(
        w1.astype(jnp.bfloat16))
    w2_p = w2.astype(jnp.bfloat16)
    w3_p = w3.astype(jnp.bfloat16)
    w4_p = jnp.zeros((HIDDEN_UNITS, PAD_OUT), jnp.bfloat16).at[:, :NUM_CLASSES].set(
        w4.astype(jnp.bfloat16))
    b4_p = jnp.zeros((1, PAD_OUT), jnp.float32).at[:, :NUM_CLASSES].set(b4)

    def _resident(shape):
        # Full-array block with a constant index_map -> DMA'd once, stays in VMEM.
        return pl.BlockSpec(shape, lambda i: (0, 0))

    in_specs = [
        pl.BlockSpec((TB, PAD_IN), lambda i: (i, 0)),          # x tiles over batch
        _resident(w1_p.shape), _resident(b1.shape),
        _resident(w2_p.shape), _resident(b2.shape),
        _resident(w3_p.shape), _resident(b3.shape),
        _resident(w4_p.shape), _resident(b4_p.shape),
    ]
    out_specs = pl.BlockSpec((TB, PAD_OUT), lambda i: (i, 0))

    out_padded = pl.pallas_call(
        mlp_kernel,
        out_shape=jax.ShapeDtypeStruct((B_pad, PAD_OUT), jnp.float32),
        grid=grid,
        in_specs=in_specs,
        out_specs=out_specs,
        compiler_params=pltpu.CompilerParams(
            dimension_semantics=("parallel",)),                # v7x: 2 TCs share batch tiles
    )(x_p, w1_p, b1, w2_p, b2, w3_p, b3, w4_p, b4_p)

    return out_padded[:B, :NUM_CLASSES]


def init_params(key):
    """Deterministic init mimicking nn.Linear's U(-1/sqrt(fan_in), 1/sqrt(fan_in))."""
    dims = [(INPUT_SIZE, HIDDEN_UNITS),
            (HIDDEN_UNITS, HIDDEN_UNITS),
            (HIDDEN_UNITS, HIDDEN_UNITS),
            (HIDDEN_UNITS, NUM_CLASSES)]
    params = []
    for (fan_in, fan_out) in dims:
        key, kw, kb = jax.random.split(key, 3)
        bound = 1.0 / jnp.sqrt(fan_in)
        # stored as [in, out] so the kernel does x @ W (equivalent to x @ W_pt.T)
        w = jax.random.uniform(kw, (fan_in, fan_out), jnp.float32, -bound, bound)
        b = jax.random.uniform(kb, (1, fan_out), jnp.float32, -bound, bound)
        params += [w, b]
    return tuple(params)


def mlp_reference(x, params):
    """Pure-JAX reference emulating the kernel's bf16-in / f32-accumulate matmuls."""
    w1, b1, w2, b2, w3, b3, w4, b4 = params

    def dot_bf16(a, w):
        return jnp.dot(a.astype(jnp.bfloat16), w.astype(jnp.bfloat16),
                       preferred_element_type=jnp.float32)

    h = _leaky_relu(dot_bf16(x, w1) + b1)
    h = _leaky_relu(dot_bf16(h, w2) + b2)
    h = _leaky_relu(dot_bf16(h, w3) + b3)
    return dot_bf16(h, w4) + b4


if __name__ == "__main__":
    key = jax.random.PRNGKey(0)
    key, kx = jax.random.split(key)
    batch = 2
    x = jax.random.normal(kx, (batch, INPUT_SIZE), jnp.float32)
    params = init_params(key)

    out = mlp_forward(x, params)
    out = jax.block_until_ready(out)

    ref = mlp_reference(x, params)
    assert out.shape == (batch, NUM_CLASSES)
    assert jnp.allclose(out, ref, atol=2e-3, rtol=2e-3), (
        f"max abs err {jnp.max(jnp.abs(out - ref))}")
    print("KERNEL_OK")
</pallas_src>

<mosaic_0001>
module attributes {stable_mosaic.version = 11 : i64} {
  func.func @mlp_kernel(%arg0: i32, %arg1: memref<16x128xbf16, #tpu.memory_space<vmem>>, %arg2: memref<128x512xbf16, #tpu.memory_space<vmem>>, %arg3: memref<1x512xf32, #tpu.memory_space<vmem>>, %arg4: memref<512x512xbf16, #tpu.memory_space<vmem>>, %arg5: memref<1x512xf32, #tpu.memory_space<vmem>>, %arg6: memref<512x512xbf16, #tpu.memory_space<vmem>>, %arg7: memref<1x512xf32, #tpu.memory_space<vmem>>, %arg8: memref<512x128xbf16, #tpu.memory_space<vmem>>, %arg9: memref<1x128xf32, #tpu.memory_space<vmem>>, %arg10: memref<16x128xf32, #tpu.memory_space<vmem>>) attributes {dimension_semantics = [#tpu.dimension_semantics<parallel>], iteration_bounds = array<i64: 1>, scalar_prefetch = 0 : i64, scratch_operands = 0 : i64, tpu.core_type = #tpu.core_type<tc>, window_params = [{transform_indices = @transform_0, window_bounds = array<i64: 16, 128>}, {pipeline_mode = #tpu.pipeline_mode<synchronous>, transform_indices = @transform_1, window_bounds = array<i64: 128, 512>}, {pipeline_mode = #tpu.pipeline_mode<synchronous>, transform_indices = @transform_2, window_bounds = array<i64: 1, 512>}, {pipeline_mode = #tpu.pipeline_mode<synchronous>, transform_indices = @transform_3, window_bounds = array<i64: 512, 512>}, {pipeline_mode = #tpu.pipeline_mode<synchronous>, transform_indices = @transform_4, window_bounds = array<i64: 1, 512>}, {pipeline_mode = #tpu.pipeline_mode<synchronous>, transform_indices = @transform_5, window_bounds = array<i64: 512, 512>}, {pipeline_mode = #tpu.pipeline_mode<synchronous>, transform_indices = @transform_6, window_bounds = array<i64: 1, 512>}, {pipeline_mode = #tpu.pipeline_mode<synchronous>, transform_indices = @transform_7, window_bounds = array<i64: 512, 128>}, {pipeline_mode = #tpu.pipeline_mode<synchronous>, transform_indices = @transform_8, window_bounds = array<i64: 1, 128>}, {transform_indices = @transform_9, window_bounds = array<i64: 16, 128>}]} {
    %c0 = arith.constant 0 : index
    %c0_0 = arith.constant 0 : index
    %0 = vector.load %arg1[%c0, %c0_0] : memref<16x128xbf16, #tpu.memory_space<vmem>>, vector<16x128xbf16>
    %c0_1 = arith.constant 0 : index
    %c0_2 = arith.constant 0 : index
    %1 = vector.load %arg2[%c0_1, %c0_2] : memref<128x512xbf16, #tpu.memory_space<vmem>>, vector<128x512xbf16>
    %cst = arith.constant dense<0.000000e+00> : vector<16x512xf32>
    %2 = tpu.matmul %0, %1, %cst {dimension_numbers = #tpu.dot_dimension_numbers<[1], [0], [0], [1], [0, 0, 1, 1], [], []>} : vector<16x128xbf16>, vector<128x512xbf16>, vector<16x512xf32> -> vector<16x512xf32>
    %c0_3 = arith.constant 0 : index
    %c0_4 = arith.constant 0 : index
    %3 = vector.load %arg3[%c0_3, %c0_4] : memref<1x512xf32, #tpu.memory_space<vmem>>, vector<1x512xf32>
    %4 = vector.broadcast %3 : vector<1x512xf32> to vector<16x512xf32>
    %5 = arith.addf %2, %4 : vector<16x512xf32>
    %cst_5 = arith.constant 0.000000e+00 : f32
    %6 = vector.broadcast %cst_5 : f32 to vector<16x512xf32>
    %7 = arith.cmpf ogt, %5, %6 : vector<16x512xf32>
    %cst_6 = arith.constant 0.00999999977 : f32
    %8 = vector.broadcast %cst_6 : f32 to vector<16x512xf32>
    %9 = arith.mulf %8, %5 : vector<16x512xf32>
    %10 = arith.select %7, %5, %9 : vector<16x512xi1>, vector<16x512xf32>
    %11 = arith.truncf %10 : vector<16x512xf32> to vector<16x512xbf16>
    %c0_7 = arith.constant 0 : index
    %c0_8 = arith.constant 0 : index
    %12 = vector.load %arg4[%c0_7, %c0_8] : memref<512x512xbf16, #tpu.memory_space<vmem>>, vector<512x512xbf16>
    %cst_9 = arith.constant dense<0.000000e+00> : vector<16x512xf32>
    %13 = tpu.matmul %11, %12, %cst_9 {dimension_numbers = #tpu.dot_dimension_numbers<[1], [0], [0], [1], [0, 0, 1, 1], [], []>} : vector<16x512xbf16>, vector<512x512xbf16>, vector<16x512xf32> -> vector<16x512xf32>
    %c0_10 = arith.constant 0 : index
    %c0_11 = arith.constant 0 : index
    %14 = vector.load %arg5[%c0_10, %c0_11] : memref<1x512xf32, #tpu.memory_space<vmem>>, vector<1x512xf32>
    %15 = vector.broadcast %14 : vector<1x512xf32> to vector<16x512xf32>
    %16 = arith.addf %13, %15 : vector<16x512xf32>
    %cst_12 = arith.constant 0.000000e+00 : f32
    %17 = vector.broadcast %cst_12 : f32 to vector<16x512xf32>
    %18 = arith.cmpf ogt, %16, %17 : vector<16x512xf32>
    %cst_13 = arith.constant 0.00999999977 : f32
    %19 = vector.broadcast %cst_13 : f32 to vector<16x512xf32>
    %20 = arith.mulf %19, %16 : vector<16x512xf32>
    %21 = arith.select %18, %16, %20 : vector<16x512xi1>, vector<16x512xf32>
    %22 = arith.truncf %21 : vector<16x512xf32> to vector<16x512xbf16>
    %c0_14 = arith.constant 0 : index
    %c0_15 = arith.constant 0 : index
    %23 = vector.load %arg6[%c0_14, %c0_15] : memref<512x512xbf16, #tpu.memory_space<vmem>>, vector<512x512xbf16>
    %cst_16 = arith.constant dense<0.000000e+00> : vector<16x512xf32>
    %24 = tpu.matmul %22, %23, %cst_16 {dimension_numbers = #tpu.dot_dimension_numbers<[1], [0], [0], [1], [0, 0, 1, 1], [], []>} : vector<16x512xbf16>, vector<512x512xbf16>, vector<16x512xf32> -> vector<16x512xf32>
    %c0_17 = arith.constant 0 : index
    %c0_18 = arith.constant 0 : index
    %25 = vector.load %arg7[%c0_17, %c0_18] : memref<1x512xf32, #tpu.memory_space<vmem>>, vector<1x512xf32>
    %26 = vector.broadcast %25 : vector<1x512xf32> to vector<16x512xf32>
    %27 = arith.addf %24, %26 : vector<16x512xf32>
    %cst_19 = arith.constant 0.000000e+00 : f32
    %28 = vector.broadcast %cst_19 : f32 to vector<16x512xf32>
    %29 = arith.cmpf ogt, %27, %28 : vector<16x512xf32>
    %cst_20 = arith.constant 0.00999999977 : f32
    %30 = vector.broadcast %cst_20 : f32 to vector<16x512xf32>
    %31 = arith.mulf %30, %27 : vector<16x512xf32>
    %32 = arith.select %29, %27, %31 : vector<16x512xi1>, vector<16x512xf32>
    %33 = arith.truncf %32 : vector<16x512xf32> to vector<16x512xbf16>
    %c0_21 = arith.constant 0 : index
    %c0_22 = arith.constant 0 : index
    %34 = vector.load %arg8[%c0_21, %c0_22] : memref<512x128xbf16, #tpu.memory_space<vmem>>, vector<512x128xbf16>
    %cst_23 = arith.constant dense<0.000000e+00> : vector<16x128xf32>
    %35 = tpu.matmul %33, %34, %cst_23 {dimension_numbers = #tpu.dot_dimension_numbers<[1], [0], [0], [1], [0, 0, 1, 1], [], []>} : vector<16x512xbf16>, vector<512x128xbf16>, vector<16x128xf32> -> vector<16x128xf32>
    %c0_24 = arith.constant 0 : index
    %c0_25 = arith.constant 0 : index
    %36 = vector.load %arg9[%c0_24, %c0_25] : memref<1x128xf32, #tpu.memory_space<vmem>>, vector<1x128xf32>
    %37 = vector.broadcast %36 : vector<1x128xf32> to vector<16x128xf32>
    %38 = arith.addf %35, %37 : vector<16x128xf32>
    %c0_26 = arith.constant 0 : index
    %c0_27 = arith.constant 0 : index
    %39 = vector.load %arg10[%c0_26, %c0_27] : memref<16x128xf32, #tpu.memory_space<vmem>>, vector<16x128xf32>
    tpu.vector_store %arg10[%c0_26, %c0_27], %38 {strides = array<i32>} : memref<16x128xf32, #tpu.memory_space<vmem>>, vector<16x128xf32>,
    return
  }
  func.func @transform_0(%arg0: i32) -> (i32, i32) {
    %c0_i32 = arith.constant 0 : i32
    %c0_i32_0 = arith.constant 0 : i32
    return %arg0, %c0_i32 : i32, i32
  }
  func.func @transform_1(%arg0: i32) -> (i32, i32) {
    %c0_i32 = arith.constant 0 : i32
    %c0_i32_0 = arith.constant 0 : i32
    %c0_i32_1 = arith.constant 0 : i32
    return %c0_i32, %c0_i32_0 : i32, i32
  }
  func.func @transform_2(%arg0: i32) -> (i32, i32) {
    %c0_i32 = arith.constant 0 : i32
    %c0_i32_0 = arith.constant 0 : i32
    %c0_i32_1 = arith.constant 0 : i32
    return %c0_i32, %c0_i32_0 : i32, i32
  }
  func.func @transform_3(%arg0: i32) -> (i32, i32) {
    %c0_i32 = arith.constant 0 : i32
    %c0_i32_0 = arith.constant 0 : i32
    %c0_i32_1 = arith.constant 0 : i32
    return %c0_i32, %c0_i32_0 : i32, i32
  }
  func.func @transform_4(%arg0: i32) -> (i32, i32) {
    %c0_i32 = arith.constant 0 : i32
    %c0_i32_0 = arith.constant 0 : i32
    %c0_i32_1 = arith.constant 0 : i32
    return %c0_i32, %c0_i32_0 : i32, i32
  }
  func.func @transform_5(%arg0: i32) -> (i32, i32) {
    %c0_i32 = arith.constant 0 : i32
    %c0_i32_0 = arith.constant 0 : i32
    %c0_i32_1 = arith.constant 0 : i32
    return %c0_i32, %c0_i32_0 : i32, i32
  }
  func.func @transform_6(%arg0: i32) -> (i32, i32) {
    %c0_i32 = arith.constant 0 : i32
    %c0_i32_0 = arith.constant 0 : i32
    %c0_i32_1 = arith.constant 0 : i32
    return %c0_i32, %c0_i32_0 : i32, i32
  }
  func.func @transform_7(%arg0: i32) -> (i32, i32) {
    %c0_i32 = arith.constant 0 : i32
    %c0_i32_0 = arith.constant 0 : i32
    %c0_i32_1 = arith.constant 0 : i32
    return %c0_i32, %c0_i32_0 : i32, i32
  }
  func.func @transform_8(%arg0: i32) -> (i32, i32) {
    %c0_i32 = arith.constant 0 : i32
    %c0_i32_0 = arith.constant 0 : i32
    %c0_i32_1 = arith.constant 0 : i32
    return %c0_i32, %c0_i32_0 : i32, i32
  }
  func.func @transform_9(%arg0: i32) -> (i32, i32) {
    %c0_i32 = arith.constant 0 : i32
    %c0_i32_0 = arith.constant 0 : i32
    return %arg0, %c0_i32 : i32, i32
  }
}

</mosaic_0001>

<llo_original>
// kernel: tpu_custom_call.1
$region0: #{tpu_custom_call.1}
  #allocation0 [shape = 'u32[]', space=smem, size = 0x4, offset = 0x4, fixed_abs, tag = 'smem constant byte address 0x4 - core index']
  #allocation1 [shape = 'u32[144,128]{1,0:T(1,128)}', space=vmem, size = 0x12000, scoped, tag = 'internal scratch']
  %s0 = inlined_call_operand.hbm [shape: bf16[16,128], index: 0, kind: input, shape index: {}]
  %s1 = inlined_call_operand.hbm [shape: bf16[128,512], index: 1, kind: input, shape index: {}]
  %s2 = inlined_call_operand.hbm [shape: f32[1,512], index: 2, kind: input, shape index: {}]
  %s3 = inlined_call_operand.hbm [shape: bf16[512,512], index: 3, kind: input, shape index: {}]
  %s4 = inlined_call_operand.vmem [shape: f32[1,512], index: 4, kind: input, shape index: {}]
  %s5 = inlined_call_operand.hbm [shape: bf16[512,512], index: 5, kind: input, shape index: {}]
  %s6 = inlined_call_operand.vmem [shape: f32[1,512], index: 6, kind: input, shape index: {}]
  %s7 = inlined_call_operand.hbm [shape: bf16[512,128], index: 7, kind: input, shape index: {}]
  %s8 = inlined_call_operand.vmem [shape: f32[1,128], index: 8, kind: input, shape index: {}]
  %s9 = inlined_call_operand.hbm [shape: f32[16,128], index: 9, kind: output, shape index: {}]
  %s10 = sld [smem:[#allocation0]]
  $region70: #{tpu_custom_call.1} parent=0
    _
  %s12 = ssub.s32 1, %s10
  %s13 = scalar_select 0, %s12, %s10
  $region1: #{tpu_custom_call.1} parent=0
    #allocation2 [shape = 'u8[4096]{0}', space=vmem, size = 0x1000, scoped, tag = 'input window, operand 0, single buffered']
    #allocation3 [shape = 's32[1]{0}', space=sflag, size = 0x4, scoped, tag = 'scoped memory for tpu_custom_call.1']
    #allocation4 [shape = 's32[1]{0}', space=sflag, size = 0x4, scoped, tag = 'scoped memory for tpu_custom_call.1']
    #allocation5 [shape = 'u8[131072]{0}', space=vmem, size = 0x20000, scoped, tag = 'input window, operand 1, single buffered']
    #allocation6 [shape = 's32[1]{0}', space=sflag, size = 0x4, scoped, tag = 'scoped memory for tpu_custom_call.1']
    #allocation7 [shape = 'u8[2048]{0}', space=vmem, size = 0x800, scoped, tag = 'input window, operand 2, single buffered']
    #allocation8 [shape = 'u8[524288]{0}', space=vmem, size = 0x80000, scoped, tag = 'input window, operand 3, single buffered']
    #allocation9 [shape = 's32[1]{0}', space=sflag, size = 0x4, scoped, tag = 'scoped memory for tpu_custom_call.1']
    #allocation10 [shape = 'u8[524288]{0}', space=vmem, size = 0x80000, scoped, tag = 'input window, operand 5, single buffered']
    #allocation11 [shape = 'u8[131072]{0}', space=vmem, size = 0x20000, scoped, tag = 'input window, operand 7, single buffered']
    #allocation12 [shape = 's32[1]{0}', space=sflag, size = 0x4, scoped, tag = 'scoped memory for tpu_custom_call.1']
    #allocation13 [shape = 'u8[8192]{0}', space=vmem, size = 0x2000, scoped, tag = 'output window, operand 0, single buffered']
    %14 = vsyncpa [#allocation3], 0
    %15 = vsyncpa [#allocation6], 0
    %16 = vsyncpa [#allocation9], 0
    %17 = vsyncpa [#allocation12], 0
    %18 = vsyncpa [#allocation4], 0
    // Predicated region
    $region2: #{tpu_custom_call.1} parent=1 // pred_check
      _
    $region3: #{tpu_custom_call.1} parent=1 // pred_check_branch
      %20 = sbr.rel (0) target = $region5
    $region4: #{tpu_custom_call.1} parent=1 // pred_region
      %s22 = ssub.s32 128, 128
      %23 = vsyncadd [#allocation3], %s22
      %s24 = sshll.u32 [#allocation2], 4
      %s25 = int_to_ptr.vmem [resolvable:$true] %s24
      %30 = dma.hbm_to_vmem [thread:$0]  %s0, 128, %s25, [#allocation3], 64, 64, 4
    $region5: #{tpu_custom_call.1} parent=1 // pred_fallthru
      _
    // Predicated region
    $region6: #{tpu_custom_call.1} parent=1 // pred_check
      _
    $region7: #{tpu_custom_call.1} parent=1 // pred_check_branch
      %32 = sbr.rel (0) target = $region9
    $region8: #{tpu_custom_call.1} parent=1 // pred_region
      %s34 = ssub.s32 4096, 4096
      %35 = vsyncadd [#allocation6], %s34
      %s36 = sshll.u32 [#allocation5], 4
      %s37 = int_to_ptr.vmem [resolvable:$true] %s36
      %42 = dma.hbm_to_vmem [thread:$0]  %s1, 4096, %s37, [#allocation6], 256, 256, 16
    $region9: #{tpu_custom_call.1} parent=1 // pred_fallthru
      _
    // Predicated region
    $region10: #{tpu_custom_call.1} parent=1 // pred_check
      _
    $region11: #{tpu_custom_call.1} parent=1 // pred_check_branch
      %44 = sbr.rel (0) target = $region13
    $region12: #{tpu_custom_call.1} parent=1 // pred_region
      %s46 = ssub.s32 64, 64
      %47 = vsyncadd [#allocation6], %s46
      %s49 = sshll.u32 [#allocation7], 4
      %s50 = int_to_ptr.vmem [resolvable:$true] %s49
      %52 = dma.hbm_to_vmem [thread:$0]  %s2, 64, %s50, [#allocation6]
    $region13: #{tpu_custom_call.1} parent=1 // pred_fallthru
      _
    // Predicated region
    $region14: #{tpu_custom_call.1} parent=1 // pred_check
      _
    $region15: #{tpu_custom_call.1} parent=1 // pred_check_branch
      %54 = sbr.rel (0) target = $region17
    $region16: #{tpu_custom_call.1} parent=1 // pred_region
      %s56 = ssub.s32 16384, 16384
      %57 = vsyncadd [#allocation9], %s56
      %s58 = sshll.u32 [#allocation8], 4
      %s59 = int_to_ptr.vmem [resolvable:$true] %s58
      %64 = dma.hbm_to_vmem [thread:$0]  %s3, 16384, %s59, [#allocation9], 256, 256, 16
    $region17: #{tpu_custom_call.1} parent=1 // pred_fallthru
      _
    // Predicated region
    $region18: #{tpu_custom_call.1} parent=1 // pred_check
      _
    $region19: #{tpu_custom_call.1} parent=1 // pred_check_branch
      %66 = sbr.rel (0) target = $region21
    $region20: #{tpu_custom_call.1} parent=1 // pred_region
      _
    $region21: #{tpu_custom_call.1} parent=1 // pred_fallthru
      _
    // Predicated region
    $region22: #{tpu_custom_call.1} parent=1 // pred_check
      _
    $region23: #{tpu_custom_call.1} parent=1 // pred_check_branch
      %68 = sbr.rel (0) target = $region25
    $region24: #{tpu_custom_call.1} parent=1 // pred_region
      %s70 = ssub.s32 16384, 16384
      %71 = vsyncadd [#allocation9], %s70
      %s72 = sshll.u32 [#allocation10], 4
      %s73 = int_to_ptr.vmem [resolvable:$true] %s72
      %78 = dma.hbm_to_vmem [thread:$0]  %s5, 16384, %s73, [#allocation9], 256, 256, 16
    $region25: #{tpu_custom_call.1} parent=1 // pred_fallthru
      _
    // Predicated region
    $region26: #{tpu_custom_call.1} parent=1 // pred_check
      _
    $region27: #{tpu_custom_call.1} parent=1 // pred_check_branch
      %80 = sbr.rel (0) target = $region29
    $region28: #{tpu_custom_call.1} parent=1 // pred_region
      _
    $region29: #{tpu_custom_call.1} parent=1 // pred_fallthru
      _
    // Predicated region
    $region30: #{tpu_custom_call.1} parent=1 // pred_check
      _
    $region31: #{tpu_custom_call.1} parent=1 // pred_check_branch
      %82 = sbr.rel (0) target = $region33
    $region32: #{tpu_custom_call.1} parent=1 // pred_region
      %s84 = ssub.s32 4096, 4096
      %85 = vsyncadd [#allocation12], %s84
      %s86 = sshll.u32 [#allocation11], 4
      %s87 = int_to_ptr.vmem [resolvable:$true] %s86
      %92 = dma.hbm_to_vmem [thread:$0]  %s7, 4096, %s87, [#allocation12], 64, 64, 4
    $region33: #{tpu_custom_call.1} parent=1 // pred_fallthru
      _
    // Predicated region
    $region34: #{tpu_custom_call.1} parent=1 // pred_check
      _
    $region35: #{tpu_custom_call.1} parent=1 // pred_check_branch
      %94 = sbr.rel (0) target = $region37
    $region36: #{tpu_custom_call.1} parent=1 // pred_region
      _
    $region37: #{tpu_custom_call.1} parent=1 // pred_fallthru
      _
    // Predicated region
    $region38: #{tpu_custom_call.1} parent=1 // pred_check
      _
    $region39: #{tpu_custom_call.1} parent=1 // pred_check_branch
      %96 = sbr.rel (0) target = $region41
    $region40: #{tpu_custom_call.1} parent=1 // pred_region
      %97 = dma.done [#allocation3], 128
    $region41: #{tpu_custom_call.1} parent=1 // pred_fallthru
      _
    // Predicated region
    $region42: #{tpu_custom_call.1} parent=1 // pred_check
      _
    $region43: #{tpu_custom_call.1} parent=1 // pred_check_branch
      %99 = sbr.rel (0) target = $region45
    $region44: #{tpu_custom_call.1} parent=1 // pred_region
      %100 = dma.done [#allocation6], 4096
    $region45: #{tpu_custom_call.1} parent=1 // pred_fallthru
      _
    // Predicated region
    $region46: #{tpu_custom_call.1} parent=1 // pred_check
      _
    $region47: #{tpu_custom_call.1} parent=1 // pred_check_branch
      %102 = sbr.rel (0) target = $region49
    $region48: #{tpu_custom_call.1} parent=1 // pred_region
      %103 = dma.done [#allocation6], 64
    $region49: #{tpu_custom_call.1} parent=1 // pred_fallthru
      _
    // Predicated region
    $region50: #{tpu_custom_call.1} parent=1 // pred_check
      _
    $region51: #{tpu_custom_call.1} parent=1 // pred_check_branch
      %105 = sbr.rel (0) target = $region53
    $region52: #{tpu_custom_call.1} parent=1 // pred_region
      %106 = dma.done [#allocation9], 16384
    $region53: #{tpu_custom_call.1} parent=1 // pred_fallthru
      _
    // Predicated region
    $region54: #{tpu_custom_call.1} parent=1 // pred_check
      _
    $region55: #{tpu_custom_call.1} parent=1 // pred_check_branch
      %108 = sbr.rel (0) target = $region57
    $region56: #{tpu_custom_call.1} parent=1 // pred_region
      %109 = dma.done [#allocation9], 16384
    $region57: #{tpu_custom_call.1} parent=1 // pred_fallthru
      _
    // Predicated region
    $region58: #{tpu_custom_call.1} parent=1 // pred_check
      _
    $region59: #{tpu_custom_call.1} parent=1 // pred_check_branch
      %111 = sbr.rel (0) target = $region61
    $region60: #{tpu_custom_call.1} parent=1 // pred_region
      %112 = dma.done [#allocation12], 4096
    $region61: #{tpu_custom_call.1} parent=1 // pred_fallthru
      _
    %v114 = vld [vmem:[#allocation2] sm:$0xf]
    %v115 = vld [vmem:[#allocation2 + $0x4] sm:$0xf]
    %v116 = vld [vmem:[#allocation5] sm:$0xff]
    %v117 = vld [vmem:[#allocation5 + $0x8] sm:$0xff]
    %v118 = vld [vmem:[#allocation5 + $0x10] sm:$0xff]
    %v119 = vld [vmem:[#allocation5 + $0x18] sm:$0xff]
    %v120 = vld [vmem:[#allocation5 + $0x20] sm:$0xff]
    %v121 = vld [vmem:[#allocation5 + $0x28] sm:$0xff]
    %v122 = vld [vmem:[#allocation5 + $0x30] sm:$0xff]
    %v123 = vld [vmem:[#allocation5 + $0x38] sm:$0xff]
    %v124 = vld [vmem:[#allocation5 + $0x40] sm:$0xff]
    %v125 = vld [vmem:[#allocation5 + $0x48] sm:$0xff]
    %v126 = vld [vmem:[#allocation5 + $0x50] sm:$0xff]
    %v127 = vld [vmem:[#allocation5 + $0x58] sm:$0xff]
    %v128 = vld [vmem:[#allocation5 + $0x60] sm:$0xff]
    %v129 = vld [vmem:[#allocation5 + $0x68] sm:$0xff]
    %v130 = vld [vmem:[#allocation5 + $0x70] sm:$0xff]
    %v131 = vld [vmem:[#allocation5 + $0x78] sm:$0xff]
    %v132 = vld [vmem:[#allocation5 + $0x80] sm:$0xff]
    %v133 = vld [vmem:[#allocation5 + $0x88] sm:$0xff]
    %v134 = vld [vmem:[#allocation5 + $0x90] sm:$0xff]
    %v135 = vld [vmem:[#allocation5 + $0x98] sm:$0xff]
    %v136 = vld [vmem:[#allocation5 + $0xa0] sm:$0xff]
    %v137 = vld [vmem:[#allocation5 + $0xa8] sm:$0xff]
    %v138 = vld [vmem:[#allocation5 + $0xb0] sm:$0xff]
    %v139 = vld [vmem:[#allocation5 + $0xb8] sm:$0xff]
    %v140 = vld [vmem:[#allocation5 + $0xc0] sm:$0xff]
    %v141 = vld [vmem:[#allocation5 + $0xc8] sm:$0xff]
    %v142 = vld [vmem:[#allocation5 + $0xd0] sm:$0xff]
    %v143 = vld [vmem:[#allocation5 + $0xd8] sm:$0xff]
    %v144 = vld [vmem:[#allocation5 + $0xe0] sm:$0xff]
    %v145 = vld [vmem:[#allocation5 + $0xe8] sm:$0xff]
    %v146 = vld [vmem:[#allocation5 + $0xf0] sm:$0xff]
    %v147 = vld [vmem:[#allocation5 + $0xf8] sm:$0xff]
    %v148 = vld [vmem:[#allocation7] sm:$0xf]
    %v150 = vlaneseq
    %v151 = vshrl.u32 %v150, 7
    %v152 = vsub.s32 0, %v151
    %v153 = vrot.slane %v148, %v152
    %v154 = vlaneseq
    %v155 = vshrl.u32 %v154, 7
    %v156 = vsub.s32 1, %v155
    %v157 = vrot.slane %v148, %v156
    %v158 = vlaneseq
    %v159 = vshrl.u32 %v158, 7
    %v160 = vsub.s32 2, %v159
    %v161 = vrot.slane %v148, %v160
    %v162 = vlaneseq
    %v163 = vshrl.u32 %v162, 7
    %v164 = vsub.s32 3, %v163
    %v165 = vrot.slane %v148, %v164
    %v172 = vunpack.c.l.b16 %v114
    %v173 = vunpack.c.l.b16 %v115
    %v174 = vpack.c.b16 %v173, %v172
    %v208 = vunpack.c.l.b16 %v116
    %v209 = vunpack.c.h.b16 %v116
    %v210 = vunpack.c.l.b16 %v117
    %v211 = vunpack.c.h.b16 %v117
    %v212 = vunpack.c.l.b16 %v118
    %v213 = vunpack.c.h.b16 %v118
    %v214 = vunpack.c.l.b16 %v119
    %v215 = vunpack.c.h.b16 %v119
    %v216 = vunpack.c.l.b16 %v120
    %v217 = vunpack.c.h.b16 %v120
    %v218 = vunpack.c.l.b16 %v121
    %v219 = vunpack.c.h.b16 %v121
    %v220 = vunpack.c.l.b16 %v122
    %v221 = vunpack.c.h.b16 %v122
    %v222 = vunpack.c.l.b16 %v123
    %v223 = vunpack.c.h.b16 %v123
    %v224 = vunpack.c.l.b16 %v124
    %v225 = vunpack.c.h.b16 %v124
    %v226 = vunpack.c.l.b16 %v125
    %v227 = vunpack.c.h.b16 %v125
    %v228 = vunpack.c.l.b16 %v126
    %v229 = vunpack.c.h.b16 %v126
    %v230 = vunpack.c.l.b16 %v127
    %v231 = vunpack.c.h.b16 %v127
    %v232 = vunpack.c.l.b16 %v128
    %v233 = vunpack.c.h.b16 %v128
    %v234 = vunpack.c.l.b16 %v129
    %v235 = vunpack.c.h.b16 %v129
    %v236 = vunpack.c.l.b16 %v130
    %v237 = vunpack.c.h.b16 %v130
    %v238 = vunpack.c.l.b16 %v131
    %v239 = vunpack.c.h.b16 %v131
    %v240 = vunpack.c.l.b16 %v132
    %v241 = vunpack.c.h.b16 %v132
    %v242 = vunpack.c.l.b16 %v133
    %v243 = vunpack.c.h.b16 %v133
    %v244 = vunpack.c.l.b16 %v134
    %v245 = vunpack.c.h.b16 %v134
    %v246 = vunpack.c.l.b16 %v135
    %v247 = vunpack.c.h.b16 %v135
    %v248 = vunpack.c.l.b16 %v136
    %v249 = vunpack.c.h.b16 %v136
    %v250 = vunpack.c.l.b16 %v137
    %v251 = vunpack.c.h.b16 %v137
    %v252 = vunpack.c.l.b16 %v138
    %v253 = vunpack.c.h.b16 %v138
    %v254 = vunpack.c.l.b16 %v139
    %v255 = vunpack.c.h.b16 %v139
    %v256 = vunpack.c.l.b16 %v140
    %v257 = vunpack.c.h.b16 %v140
    %v258 = vunpack.c.l.b16 %v141
    %v259 = vunpack.c.h.b16 %v141
    %v260 = vunpack.c.l.b16 %v142
    %v261 = vunpack.c.h.b16 %v142
    %v262 = vunpack.c.l.b16 %v143
    %v263 = vunpack.c.h.b16 %v143
    %v264 = vunpack.c.l.b16 %v144
    %v265 = vunpack.c.h.b16 %v144
    %v266 = vunpack.c.l.b16 %v145
    %v267 = vunpack.c.h.b16 %v145
    %v268 = vunpack.c.l.b16 %v146
    %v269 = vunpack.c.h.b16 %v146
    %v270 = vunpack.c.l.b16 %v147
    %v271 = vunpack.c.h.b16 %v147
    %v272 = vpack.c.b16 %v212, %v208
    %v273 = vpack.c.b16 %v213, %v209
    %v274 = vpack.c.b16 %v214, %v210
    %v275 = vpack.c.b16 %v215, %v211
    %v276 = vpack.c.b16 %v220, %v216
    %v277 = vpack.c.b16 %v221, %v217
    %v278 = vpack.c.b16 %v222, %v218
    %v279 = vpack.c.b16 %v223, %v219
    %v280 = vpack.c.b16 %v228, %v224
    %v281 = vpack.c.b16 %v229, %v225
    %v282 = vpack.c.b16 %v230, %v226
    %v283 = vpack.c.b16 %v231, %v227
    %v284 = vpack.c.b16 %v236, %v232
    %v285 = vpack.c.b16 %v237, %v233
    %v286 = vpack.c.b16 %v238, %v234
    %v287 = vpack.c.b16 %v239, %v235
    %v288 = vpack.c.b16 %v244, %v240
    %v289 = vpack.c.b16 %v245, %v241
    %v290 = vpack.c.b16 %v246, %v242
    %v291 = vpack.c.b16 %v247, %v243
    %v292 = vpack.c.b16 %v252, %v248
    %v293 = vpack.c.b16 %v253, %v249
    %v294 = vpack.c.b16 %v254, %v250
    %v295 = vpack.c.b16 %v255, %v251
    %v296 = vpack.c.b16 %v260, %v256
    %v297 = vpack.c.b16 %v261, %v257
    %v298 = vpack.c.b16 %v262, %v258
    %v299 = vpack.c.b16 %v263, %v259
    %v300 = vpack.c.b16 %v268, %v264
    %v301 = vpack.c.b16 %v269, %v265
    %v302 = vpack.c.b16 %v270, %v266
    %v303 = vpack.c.b16 %v271, %v267
    %336 = vmatprep.subr.bf16.mxu0 %v301
    %337 = vmatpush1.bf16.msra.mxu0 %v300
    %338 = vmatprep.subr.bf16.mxu0 %v297
    %339 = vmatpush1.bf16.msra.mxu0 %v296
    %340 = vmatprep.subr.bf16.mxu0 %v293
    %341 = vmatpush1.bf16.msra.mxu0 %v292
    %342 = vmatprep.subr.bf16.mxu0 %v289
    %343 = vmatpush1.bf16.msra.mxu0 %v288
    %344 = vmatprep.subr.bf16.mxu0 %v285
    %345 = vmatpush1.bf16.msra.mxu0 %v284
    %346 = vmatprep.subr.bf16.mxu0 %v281
    %347 = vmatpush1.bf16.msra.mxu0 %v280
    %348 = vmatprep.subr.bf16.mxu0 %v277
    %349 = vmatpush1.bf16.msra.mxu0 %v276
    %350 = vmatprep.subr.bf16.mxu0 %v273
    %351 = vmatpush1.bf16.msra.mxu0 %v272
    %352 = vmatprep.subr.bf16.mxu0 0
    %353 = vmatpush2.bf16.msra.mxu0 0
    %354 = vmatprep.subr.bf16.mxu0 0
    %355 = vmatpush2.bf16.msra.mxu0 0
    %356 = vmatprep.subr.bf16.mxu0 0
    %357 = vmatpush2.bf16.msra.mxu0 0
    %358 = vmatprep.subr.bf16.mxu0 0
    %359 = vmatpush2.bf16.msra.mxu0 0
    %360 = vmatprep.subr.bf16.mxu0 0
    %361 = vmatpush2.bf16.msra.mxu0 0
    %362 = vmatprep.subr.bf16.mxu0 0
    %363 = vmatpush2.bf16.msra.mxu0 0
    %364 = vmatprep.subr.bf16.mxu0 0
    %365 = vmatpush2.bf16.msra.mxu0 0
    %366 = vmatprep.subr.bf16.mxu0 0
    %367 = vmatpush2.bf16.msra.mxu0 0
    %368 = vmatprep.mubr.bf16.mxu0 0
    %369 = vmatmul.mubr.bf16.gmra.mxu0 %v174
    %v370 = vpop.f32.mrf.mxu0
    %v371 = vadd.f32 %v153, %v370
    %v372 = vpop.f32.mrf.mxu0
    %v373 = vadd.f32 %v157, %v372
    %v374 = vpop.f32.mrf.mxu0
    %v375 = vadd.f32 %v153, %v374
    %v376 = vpop.f32.mrf.mxu0
    %v377 = vadd.f32 %v157, %v376
    %378 = vdwg.mxu0
    %379 = vmatprep.subr.bf16.mxu0 %v303
    %380 = vmatpush1.bf16.msra.mxu0 %v302
    %381 = vmatprep.subr.bf16.mxu0 %v299
    %382 = vmatpush1.bf16.msra.mxu0 %v298
    %383 = vmatprep.subr.bf16.mxu0 %v295
    %384 = vmatpush1.bf16.msra.mxu0 %v294
    %385 = vmatprep.subr.bf16.mxu0 %v291
    %386 = vmatpush1.bf16.msra.mxu0 %v290
    %387 = vmatprep.subr.bf16.mxu0 %v287
    %388 = vmatpush1.bf16.msra.mxu0 %v286
    %389 = vmatprep.subr.bf16.mxu0 %v283
    %390 = vmatpush1.bf16.msra.mxu0 %v282
    %391 = vmatprep.subr.bf16.mxu0 %v279
    %392 = vmatpush1.bf16.msra.mxu0 %v278
    %393 = vmatprep.subr.bf16.mxu0 %v275
    %394 = vmatpush1.bf16.msra.mxu0 %v274
    %395 = vmatprep.subr.bf16.mxu0 0
    %396 = vmatpush2.bf16.msra.mxu0 0
    %397 = vmatprep.subr.bf16.mxu0 0
    %398 = vmatpush2.bf16.msra.mxu0 0
    %399 = vmatprep.subr.bf16.mxu0 0
    %400 = vmatpush2.bf16.msra.mxu0 0
    %401 = vmatprep.subr.bf16.mxu0 0
    %402 = vmatpush2.bf16.msra.mxu0 0
    %403 = vmatprep.subr.bf16.mxu0 0
    %404 = vmatpush2.bf16.msra.mxu0 0
    %405 = vmatprep.subr.bf16.mxu0 0
    %406 = vmatpush2.bf16.msra.mxu0 0
    %407 = vmatprep.subr.bf16.mxu0 0
    %408 = vmatpush2.bf16.msra.mxu0 0
    %409 = vmatprep.subr.bf16.mxu0 0
    %410 = vmatpush2.bf16.msra.mxu0 0
    %411 = vmatprep.mubr.bf16.mxu0 0
    %412 = vmatmul.mubr.bf16.gmra.mxu0 %v174
    %v413 = vpop.f32.mrf.mxu0
    %v414 = vadd.f32 %v161, %v413
    %v415 = vpop.f32.mrf.mxu0
    %v416 = vadd.f32 %v165, %v415
    %v417 = vpop.f32.mrf.mxu0
    %v418 = vadd.f32 %v161, %v417
    %v419 = vpop.f32.mrf.mxu0
    %v420 = vadd.f32 %v165, %v419
    %421 = vdwg.mxu0
    %vm422 = vcmp.gt.f32.partialorder %v371, 0.0
    %vm423 = vcmp.gt.f32.partialorder %v373, 0.0
    %vm424 = vcmp.gt.f32.partialorder %v414, 0.0
    %vm425 = vcmp.gt.f32.partialorder %v416, 0.0
    %vm426 = vcmp.gt.f32.partialorder %v375, 0.0
    %vm427 = vcmp.gt.f32.partialorder %v377, 0.0
    %vm428 = vcmp.gt.f32.partialorder %v418, 0.0
    %vm429 = vcmp.gt.f32.partialorder %v420, 0.0
    %v430 = vmul.f32 %v371, 0.01
    %v431 = vmul.f32 %v373, 0.01
    %v432 = vmul.f32 %v414, 0.01
    %v433 = vmul.f32 %v416, 0.01
    %v434 = vmul.f32 %v375, 0.01
    %v435 = vmul.f32 %v377, 0.01
    %v436 = vmul.f32 %v418, 0.01
    %v437 = vmul.f32 %v420, 0.01
    %v438 = vsel %vm422, %v371, %v430
    %v439 = vsel %vm423, %v373, %v431
    %v440 = vsel %vm424, %v414, %v432
    %v441 = vsel %vm425, %v416, %v433
    %v442 = vsel %vm426, %v375, %v434
    %v443 = vsel %vm427, %v377, %v435
    %v444 = vsel %vm428, %v418, %v436
    %v445 = vsel %vm429, %v420, %v437
    %v446 = vpack.c.bf16 %v442, %v438
    %v447 = vpack.c.bf16 %v443, %v439
    %v448 = vpack.c.bf16 %v444, %v440
    %v449 = vpack.c.bf16 %v445, %v441
    %v450 = vld [vmem:[#allocation8] sm:$0xff]
    %v451 = vld [vmem:[#allocation8 + $0x8] sm:$0xff]
    %v452 = vld [vmem:[#allocation8 + $0x10] sm:$0xff]
    %v453 = vld [vmem:[#allocation8 + $0x18] sm:$0xff]
    %v454 = vld [vmem:[#allocation8 + $0x20] sm:$0xff]
    %v455 = vld [vmem:[#allocation8 + $0x28] sm:$0xff]
    %v456 = vld [vmem:[#allocation8 + $0x30] sm:$0xff]
    %v457 = vld [vmem:[#allocation8 + $0x38] sm:$0xff]
    %v458 = vld [vmem:[#allocation8 + $0x40] sm:$0xff]
    %v459 = vld [vmem:[#allocation8 + $0x48] sm:$0xff]
    %v460 = vld [vmem:[#allocation8 + $0x50] sm:$0xff]
    %v461 = vld [vmem:[#allocation8 + $0x58] sm:$0xff]
    %v462 = vld [vmem:[#allocation8 + $0x60] sm:$0xff]
    %v463 = vld [vmem:[#allocation8 + $0x68] sm:$0xff]
    %v464 = vld [vmem:[#allocation8 + $0x70] sm:$0xff]
    %v465 = vld [vmem:[#allocation8 + $0x78] sm:$0xff]
    %v466 = vld [vmem:[#allocation8 + $0x80] sm:$0xff]
    %v467 = vld [vmem:[#allocation8 + $0x88] sm:$0xff]
    %v468 = vld [vmem:[#allocation8 + $0x90] sm:$0xff]
    %v469 = vld [vmem:[#allocation8 + $0x98] sm:$0xff]
    %v470 = vld [vmem:[#allocation8 + $0xa0] sm:$0xff]
    %v471 = vld [vmem:[#allocation8 + $0xa8] sm:$0xff]
    %v472 = vld [vmem:[#allocation8 + $0xb0] sm:$0xff]
    %v473 = vld [vmem:[#allocation8 + $0xb8] sm:$0xff]
    %v474 = vld [vmem:[#allocation8 + $0xc0] sm:$0xff]
    %v475 = vld [vmem:[#allocation8 + $0xc8] sm:$0xff]
    %v476 = vld [vmem:[#allocation8 + $0xd0] sm:$0xff]
    %v477 = vld [vmem:[#allocation8 + $0xd8] sm:$0xff]
    %v478 = vld [vmem:[#allocation8 + $0xe0] sm:$0xff]
    %v479 = vld [vmem:[#allocation8 + $0xe8] sm:$0xff]
    %v480 = vld [vmem:[#allocation8 + $0xf0] sm:$0xff]
    %v481 = vld [vmem:[#allocation8 + $0xf8] sm:$0xff]
    %v482 = vld [vmem:[#allocation8 + $0x100] sm:$0xff]
    %v483 = vld [vmem:[#allocation8 + $0x108] sm:$0xff]
    %v484 = vld [vmem:[#allocation8 + $0x110] sm:$0xff]
    %v485 = vld [vmem:[#allocation8 + $0x118] sm:$0xff]
    %v486 = vld [vmem:[#allocation8 + $0x120] sm:$0xff]
    %v487 = vld [vmem:[#allocation8 + $0x128] sm:$0xff]
    %v488 = vld [vmem:[#allocation8 + $0x130] sm:$0xff]
    %v489 = vld [vmem:[#allocation8 + $0x138] sm:$0xff]
    %v490 = vld [vmem:[#allocation8 + $0x140] sm:$0xff]
    %v491 = vld [vmem:[#allocation8 + $0x148] sm:$0xff]
    %v492 = vld [vmem:[#allocation8 + $0x150] sm:$0xff]
    %v493 = vld [vmem:[#allocation8 + $0x158] sm:$0xff]
    %v494 = vld [vmem:[#allocation8 + $0x160] sm:$0xff]
    %v495 = vld [vmem:[#allocation8 + $0x168] sm:$0xff]
    %v496 = vld [vmem:[#allocation8 + $0x170] sm:$0xff]
    %v497 = vld [vmem:[#allocation8 + $0x178] sm:$0xff]
    %v498 = vld [vmem:[#allocation8 + $0x180] sm:$0xff]
    %v499 = vld [vmem:[#allocation8 + $0x188] sm:$0xff]
    %v500 = vld [vmem:[#allocation8 + $0x190] sm:$0xff]
    %v501 = vld [vmem:[#allocation8 + $0x198] sm:$0xff]
    %v502 = vld [vmem:[#allocation8 + $0x1a0] sm:$0xff]
    %v503 = vld [vmem:[#allocation8 + $0x1a8] sm:$0xff]
    %v504 = vld [vmem:[#allocation8 + $0x1b0] sm:$0xff]
    %v505 = vld [vmem:[#allocation8 + $0x1b8] sm:$0xff]
    %v506 = vld [vmem:[#allocation8 + $0x1c0] sm:$0xff]
    %v507 = vld [vmem:[#allocation8 + $0x1c8] sm:$0xff]
    %v508 = vld [vmem:[#allocation8 + $0x1d0] sm:$0xff]
    %v509 = vld [vmem:[#allocation8 + $0x1d8] sm:$0xff]
    %v510 = vld [vmem:[#allocation8 + $0x1e0] sm:$0xff]
    %v511 = vld [vmem:[#allocation8 + $0x1e8] sm:$0xff]
    %v512 = vld [vmem:[#allocation8 + $0x1f0] sm:$0xff]
    %v513 = vld [vmem:[#allocation8 + $0x1f8] sm:$0xff]
    %v514 = vld [vmem:[#allocation8 + $0x200] sm:$0xff]
    %v515 = vld [vmem:[#allocation8 + $0x208] sm:$0xff]
    %v516 = vld [vmem:[#allocation8 + $0x210] sm:$0xff]
    %v517 = vld [vmem:[#allocation8 + $0x218] sm:$0xff]
    %v518 = vld [vmem:[#allocation8 + $0x220] sm:$0xff]
    %v519 = vld [vmem:[#allocation8 + $0x228] sm:$0xff]
    %v520 = vld [vmem:[#allocation8 + $0x230] sm:$0xff]
    %v521 = vld [vmem:[#allocation8 + $0x238] sm:$0xff]
    %v522 = vld [vmem:[#allocation8 + $0x240] sm:$0xff]
    %v523 = vld [vmem:[#allocation8 + $0x248] sm:$0xff]
    %v524 = vld [vmem:[#allocation8 + $0x250] sm:$0xff]
    %v525 = vld [vmem:[#allocation8 + $0x258] sm:$0xff]
    %v526 = vld [vmem:[#allocation8 + $0x260] sm:$0xff]
    %v527 = vld [vmem:[#allocation8 + $0x268] sm:$0xff]
    %v528 = vld [vmem:[#allocation8 + $0x270] sm:$0xff]
    %v529 = vld [vmem:[#allocation8 + $0x278] sm:$0xff]
    %v530 = vld [vmem:[#allocation8 + $0x280] sm:$0xff]
    %v531 = vld [vmem:[#allocation8 + $0x288] sm:$0xff]
    %v532 = vld [vmem:[#allocation8 + $0x290] sm:$0xff]
    %v533 = vld [vmem:[#allocation8 + $0x298] sm:$0xff]
    %v534 = vld [vmem:[#allocation8 + $0x2a0] sm:$0xff]
    %v535 = vld [vmem:[#allocation8 + $0x2a8] sm:$0xff]
    %v536 = vld [vmem:[#allocation8 + $0x2b0] sm:$0xff]
    %v537 = vld [vmem:[#allocation8 + $0x2b8] sm:$0xff]
    %v538 = vld [vmem:[#allocation8 + $0x2c0] sm:$0xff]
    %v539 = vld [vmem:[#allocation8 + $0x2c8] sm:$0xff]
    %v540 = vld [vmem:[#allocation8 + $0x2d0] sm:$0xff]
    %v541 = vld [vmem:[#allocation8 + $0x2d8] sm:$0xff]
    %v542 = vld [vmem:[#allocation8 + $0x2e0] sm:$0xff]
    %v543 = vld [vmem:[#allocation8 + $0x2e8] sm:$0xff]
    %v544 = vld [vmem:[#allocation8 + $0x2f0] sm:$0xff]
    %v545 = vld [vmem:[#allocation8 + $0x2f8] sm:$0xff]
    %v546 = vld [vmem:[#allocation8 + $0x300] sm:$0xff]
    %v547 = vld [vmem:[#allocation8 + $0x308] sm:$0xff]
    %v548 = vld [vmem:[#allocation8 + $0x310] sm:$0xff]
    %v549 = vld [vmem:[#allocation8 + $0x318] sm:$0xff]
    %v550 = vld [vmem:[#allocation8 + $0x320] sm:$0xff]
    %v551 = vld [vmem:[#allocation8 + $0x328] sm:$0xff]
    %v552 = vld [vmem:[#allocation8 + $0x330] sm:$0xff]
    %v553 = vld [vmem:[#allocation8 + $0x338] sm:$0xff]
    %v554 = vld [vmem:[#allocation8 + $0x340] sm:$0xff]
    %v555 = vld [vmem:[#allocation8 + $0x348] sm:$0xff]
    %v556 = vld [vmem:[#allocation8 + $0x350] sm:$0xff]
    %v557 = vld [vmem:[#allocation8 + $0x358] sm:$0xff]
    %v558 = vld [vmem:[#allocation8 + $0x360] sm:$0xff]
    %v559 = vld [vmem:[#allocation8 + $0x368] sm:$0xff]
    %v560 = vld [vmem:[#allocation8 + $0x370] sm:$0xff]
    %v561 = vld [vmem:[#allocation8 + $0x378] sm:$0xff]
    %v562 = vld [vmem:[#allocation8 + $0x380] sm:$0xff]
    %v563 = vld [vmem:[#allocation8 + $0x388] sm:$0xff]
    %v564 = vld [vmem:[#allocation8 + $0x390] sm:$0xff]
    %v565 = vld [vmem:[#allocation8 + $0x398] sm:$0xff]
    %v566 = vld [vmem:[#allocation8 + $0x3a0] sm:$0xff]
    %v567 = vld [vmem:[#allocation8 + $0x3a8] sm:$0xff]
    %v568 = vld [vmem:[#allocation8 + $0x3b0] sm:$0xff]
    %v569 = vld [vmem:[#allocation8 + $0x3b8] sm:$0xff]
    %v570 = vld [vmem:[#allocation8 + $0x3c0] sm:$0xff]
    %v571 = vld [vmem:[#allocation8 + $0x3c8] sm:$0xff]
    %v572 = vld [vmem:[#allocation8 + $0x3d0] sm:$0xff]
    %v573 = vld [vmem:[#allocation8 + $0x3d8] sm:$0xff]
    %v574 = vld [vmem:[#allocation8 + $0x3e0] sm:$0xff]
    %v575 = vld [vmem:[#allocation8 + $0x3e8] sm:$0xff]
    %v576 = vld [vmem:[#allocation8 + $0x3f0] sm:$0xff]
    %v577 = vld [vmem:[#allocation8 + $0x3f8] sm:$0xff]
    %v578 = vld [vmem:[%s4] sm:$0xf]
    %v580 = vlaneseq
    %v581 = vshrl.u32 %v580, 7
    %v582 = vsub.s32 0, %v581
    %v583 = vrot.slane %v578, %v582
    %v584 = vlaneseq
    %v585 = vshrl.u32 %v584, 7
    %v586 = vsub.s32 1, %v585
    %v587 = vrot.slane %v578, %v586
    %v588 = vlaneseq
    %v589 = vshrl.u32 %v588, 7
    %v590 = vsub.s32 2, %v589
    %v591 = vrot.slane %v578, %v590
    %v592 = vlaneseq
    %v593 = vshrl.u32 %v592, 7
    %v594 = vsub.s32 3, %v593
    %v595 = vrot.slane %v578, %v594
    %v728 = vunpack.c.l.b16 %v450
    %v729 = vunpack.c.h.b16 %v450
    %v730 = vunpack.c.l.b16 %v451
    %v731 = vunpack.c.h.b16 %v451
    %v732 = vunpack.c.l.b16 %v452
    %v733 = vunpack.c.h.b16 %v452
    %v734 = vunpack.c.l.b16 %v453
    %v735 = vunpack.c.h.b16 %v453
    %v736 = vunpack.c.l.b16 %v454
    %v737 = vunpack.c.h.b16 %v454
    %v738 = vunpack.c.l.b16 %v455
    %v739 = vunpack.c.h.b16 %v455
    %v740 = vunpack.c.l.b16 %v456
    %v741 = vunpack.c.h.b16 %v456
    %v742 = vunpack.c.l.b16 %v457
    %v743 = vunpack.c.h.b16 %v457
    %v744 = vunpack.c.l.b16 %v458
    %v745 = vunpack.c.h.b16 %v458
    %v746 = vunpack.c.l.b16 %v459
    %v747 = vunpack.c.h.b16 %v459
    %v748 = vunpack.c.l.b16 %v460
    %v749 = vunpack.c.h.b16 %v460
    %v750 = vunpack.c.l.b16 %v461
    %v751 = vunpack.c.h.b16 %v461
    %v752 = vunpack.c.l.b16 %v462
    %v753 = vunpack.c.h.b16 %v462
    %v754 = vunpack.c.l.b16 %v463
    %v755 = vunpack.c.h.b16 %v463
    %v756 = vunpack.c.l.b16 %v464
    %v757 = vunpack.c.h.b16 %v464
    %v758 = vunpack.c.l.b16 %v465
    %v759 = vunpack.c.h.b16 %v465
    %v760 = vunpack.c.l.b16 %v466
    %v761 = vunpack.c.h.b16 %v466
    %v762 = vunpack.c.l.b16 %v467
    %v763 = vunpack.c.h.b16 %v467
    %v764 = vunpack.c.l.b16 %v468
    %v765 = vunpack.c.h.b16 %v468
    %v766 = vunpack.c.l.b16 %v469
    %v767 = vunpack.c.h.b16 %v469
    %v768 = vunpack.c.l.b16 %v470
    %v769 = vunpack.c.h.b16 %v470
    %v770 = vunpack.c.l.b16 %v471
    %v771 = vunpack.c.h.b16 %v471
    %v772 = vunpack.c.l.b16 %v472
    %v773 = vunpack.c.h.b16 %v472
    %v774 = vunpack.c.l.b16 %v473
    %v775 = vunpack.c.h.b16 %v473
    %v776 = vunpack.c.l.b16 %v474
    %v777 = vunpack.c.h.b16 %v474
    %v778 = vunpack.c.l.b16 %v475
    %v779 = vunpack.c.h.b16 %v475
    %v780 = vunpack.c.l.b16 %v476
    %v781 = vunpack.c.h.b16 %v476
    %v782 = vunpack.c.l.b16 %v477
    %v783 = vunpack.c.h.b16 %v477
    %v784 = vunpack.c.l.b16 %v478
    %v785 = vunpack.c.h.b16 %v478
    %v786 = vunpack.c.l.b16 %v479
    %v787 = vunpack.c.h.b16 %v479
    %v788 = vunpack.c.l.b16 %v480
    %v789 = vunpack.c.h.b16 %v480
    %v790 = vunpack.c.l.b16 %v481
    %v791 = vunpack.c.h.b16 %v481
    %v792 = vunpack.c.l.b16 %v482
    %v793 = vunpack.c.h.b16 %v482
    %v794 = vunpack.c.l.b16 %v483
    %v795 = vunpack.c.h.b16 %v483
    %v796 = vunpack.c.l.b16 %v484
    %v797 = vunpack.c.h.b16 %v484
    %v798 = vunpack.c.l.b16 %v485
    %v799 = vunpack.c.h.b16 %v485
    %v800 = vunpack.c.l.b16 %v486
    %v801 = vunpack.c.h.b16 %v486
    %v802 = vunpack.c.l.b16 %v487
    %v803 = vunpack.c.h.b16 %v487
    %v804 = vunpack.c.l.b16 %v488
    %v805 = vunpack.c.h.b16 %v488
    %v806 = vunpack.c.l.b16 %v489
    %v807 = vunpack.c.h.b16 %v489
    %v808 = vunpack.c.l.b16 %v490
    %v809 = vunpack.c.h.b16 %v490
    %v810 = vunpack.c.l.b16 %v491
    %v811 = vunpack.c.h.b16 %v491
    %v812 = vunpack.c.l.b16 %v492
    %v813 = vunpack.c.h.b16 %v492
    %v814 = vunpack.c.l.b16 %v493
    %v815 = vunpack.c.h.b16 %v493
    %v816 = vunpack.c.l.b16 %v494
    %v817 = vunpack.c.h.b16 %v494
    %v818 = vunpack.c.l.b16 %v495
    %v819 = vunpack.c.h.b16 %v495
    %v820 = vunpack.c.l.b16 %v496
    %v821 = vunpack.c.h.b16 %v496
    %v822 = vunpack.c.l.b16 %v497
    %v823 = vunpack.c.h.b16 %v497
    %v824 = vunpack.c.l.b16 %v498
    %v825 = vunpack.c.h.b16 %v498
    %v826 = vunpack.c.l.b16 %v499
    %v827 = vunpack.c.h.b16 %v499
    %v828 = vunpack.c.l.b16 %v500
    %v829 = vunpack.c.h.b16 %v500
    %v830 = vunpack.c.l.b16 %v501
    %v831 = vunpack.c.h.b16 %v501
    %v832 = vunpack.c.l.b16 %v502
    %v833 = vunpack.c.h.b16 %v502
    %v834 = vunpack.c.l.b16 %v503
    %v835 = vunpack.c.h.b16 %v503
    %v836 = vunpack.c.l.b16 %v504
    %v837 = vunpack.c.h.b16 %v504
    %v838 = vunpack.c.l.b16 %v505
    %v839 = vunpack.c.h.b16 %v505
    %v840 = vunpack.c.l.b16 %v506
    %v841 = vunpack.c.h.b16 %v506
    %v842 = vunpack.c.l.b16 %v507
    %v843 = vunpack.c.h.b16 %v507
    %v844 = vunpack.c.l.b16 %v508
    %v845 = vunpack.c.h.b16 %v508
    %v846 = vunpack.c.l.b16 %v509
    %v847 = vunpack.c.h.b16 %v509
    %v848 = vunpack.c.l.b16 %v510
    %v849 = vunpack.c.h.b16 %v510
    %v850 = vunpack.c.l.b16 %v511
    %v851 = vunpack.c.h.b16 %v511
    %v852 = vunpack.c.l.b16 %v512
    %v853 = vunpack.c.h.b16 %v512
    %v854 = vunpack.c.l.b16 %v513
    %v855 = vunpack.c.h.b16 %v513
    %v856 = vunpack.c.l.b16 %v514
    %v857 = vunpack.c.h.b16 %v514
    %v858 = vunpack.c.l.b16 %v515
    %v859 = vunpack.c.h.b16 %v515
    %v860 = vunpack.c.l.b16 %v516
    %v861 = vunpack.c.h.b16 %v516
    %v862 = vunpack.c.l.b16 %v517
    %v863 = vunpack.c.h.b16 %v517
    %v864 = vunpack.c.l.b16 %v518
    %v865 = vunpack.c.h.b16 %v518
    %v866 = vunpack.c.l.b16 %v519
    %v867 = vunpack.c.h.b16 %v519
    %v868 = vunpack.c.l.b16 %v520
    %v869 = vunpack.c.h.b16 %v520
    %v870 = vunpack.c.l.b16 %v521
    %v871 = vunpack.c.h.b16 %v521
    %v872 = vunpack.c.l.b16 %v522
    %v873 = vunpack.c.h.b16 %v522
    %v874 = vunpack.c.l.b16 %v523
    %v875 = vunpack.c.h.b16 %v523
    %v876 = vunpack.c.l.b16 %v524
    %v877 = vunpack.c.h.b16 %v524
    %v878 = vunpack.c.l.b16 %v525
    %v879 = vunpack.c.h.b16 %v525
    %v880 = vunpack.c.l.b16 %v526
    %v881 = vunpack.c.h.b16 %v526
    %v882 = vunpack.c.l.b16 %v527
    %v883 = vunpack.c.h.b16 %v527
    %v884 = vunpack.c.l.b16 %v528
    %v885 = vunpack.c.h.b16 %v528
    %v886 = vunpack.c.l.b16 %v529
    %v887 = vunpack.c.h.b16 %v529
    %v888 = vunpack.c.l.b16 %v530
    %v889 = vunpack.c.h.b16 %v530
    %v890 = vunpack.c.l.b16 %v531
    %v891 = vunpack.c.h.b16 %v531
    %v892 = vunpack.c.l.b16 %v532
    %v893 = vunpack.c.h.b16 %v532
    %v894 = vunpack.c.l.b16 %v533
    %v895 = vunpack.c.h.b16 %v533
    %v896 = vunpack.c.l.b16 %v534
    %v897 = vunpack.c.h.b16 %v534
    %v898 = vunpack.c.l.b16 %v535
    %v899 = vunpack.c.h.b16 %v535
    %v900 = vunpack.c.l.b16 %v536
    %v901 = vunpack.c.h.b16 %v536
    %v902 = vunpack.c.l.b16 %v537
    %v903 = vunpack.c.h.b16 %v537
    %v904 = vunpack.c.l.b16 %v538
    %v905 = vunpack.c.h.b16 %v538
    %v906 = vunpack.c.l.b16 %v539
    %v907 = vunpack.c.h.b16 %v539
    %v908 = vunpack.c.l.b16 %v540
    %v909 = vunpack.c.h.b16 %v540
    %v910 = vunpack.c.l.b16 %v541
    %v911 = vunpack.c.h.b16 %v541
    %v912 = vunpack.c.l.b16 %v542
    %v913 = vunpack.c.h.b16 %v542
    %v914 = vunpack.c.l.b16 %v543
    %v915 = vunpack.c.h.b16 %v543
    %v916 = vunpack.c.l.b16 %v544
    %v917 = vunpack.c.h.b16 %v544
    %v918 = vunpack.c.l.b16 %v545
    %v919 = vunpack.c.h.b16 %v545
    %v920 = vunpack.c.l.b16 %v546
    %v921 = vunpack.c.h.b16 %v546
    %v922 = vunpack.c.l.b16 %v547
    %v923 = vunpack.c.h.b16 %v547
    %v924 = vunpack.c.l.b16 %v548
    %v925 = vunpack.c.h.b16 %v548
    %v926 = vunpack.c.l.b16 %v549
    %v927 = vunpack.c.h.b16 %v549
    %v928 = vunpack.c.l.b16 %v550
    %v929 = vunpack.c.h.b16 %v550
    %v930 = vunpack.c.l.b16 %v551
    %v931 = vunpack.c.h.b16 %v551
    %v932 = vunpack.c.l.b16 %v552
    %v933 = vunpack.c.h.b16 %v552
    %v934 = vunpack.c.l.b16 %v553
    %v935 = vunpack.c.h.b16 %v553
    %v936 = vunpack.c.l.b16 %v554
    %v937 = vunpack.c.h.b16 %v554
    %v938 = vunpack.c.l.b16 %v555
    %v939 = vunpack.c.h.b16 %v555
    %v940 = vunpack.c.l.b16 %v556
    %v941 = vunpack.c.h.b16 %v556
    %v942 = vunpack.c.l.b16 %v557
    %v943 = vunpack.c.h.b16 %v557
    %v944 = vunpack.c.l.b16 %v558
    %v945 = vunpack.c.h.b16 %v558
    %v946 = vunpack.c.l.b16 %v559
    %v947 = vunpack.c.h.b16 %v559
    %v948 = vunpack.c.l.b16 %v560
    %v949 = vunpack.c.h.b16 %v560
    %v950 = vunpack.c.l.b16 %v561
    %v951 = vunpack.c.h.b16 %v561
    %v952 = vunpack.c.l.b16 %v562
    %v953 = vunpack.c.h.b16 %v562
    %v954 = vunpack.c.l.b16 %v563
    %v955 = vunpack.c.h.b16 %v563
    %v956 = vunpack.c.l.b16 %v564
    %v957 = vunpack.c.h.b16 %v564
    %v958 = vunpack.c.l.b16 %v565
    %v959 = vunpack.c.h.b16 %v565
    %v960 = vunpack.c.l.b16 %v566
    %v961 = vunpack.c.h.b16 %v566
    %v962 = vunpack.c.l.b16 %v567
    %v963 = vunpack.c.h.b16 %v567
    %v964 = vunpack.c.l.b16 %v568
    %v965 = vunpack.c.h.b16 %v568
    %v966 = vunpack.c.l.b16 %v569
    %v967 = vunpack.c.h.b16 %v569
    %v968 = vunpack.c.l.b16 %v570
    %v969 = vunpack.c.h.b16 %v570
    %v970 = vunpack.c.l.b16 %v571
    %v971 = vunpack.c.h.b16 %v571
    %v972 = vunpack.c.l.b16 %v572
    %v973 = vunpack.c.h.b16 %v572
    %v974 = vunpack.c.l.b16 %v573
    %v975 = vunpack.c.h.b16 %v573
    %v976 = vunpack.c.l.b16 %v574
    %v977 = vunpack.c.h.b16 %v574
    %v978 = vunpack.c.l.b16 %v575
    %v979 = vunpack.c.h.b16 %v575
    %v980 = vunpack.c.l.b16 %v576
    %v981 = vunpack.c.h.b16 %v576
    %v982 = vunpack.c.l.b16 %v577
    %v983 = vunpack.c.h.b16 %v577
    %v984 = vpack.c.b16 %v732, %v728
    %v985 = vpack.c.b16 %v733, %v729
    %v986 = vpack.c.b16 %v734, %v730
    %v987 = vpack.c.b16 %v735, %v731
    %v988 = vpack.c.b16 %v740, %v736
    %v989 = vpack.c.b16 %v741, %v737
    %v990 = vpack.c.b16 %v742, %v738
    %v991 = vpack.c.b16 %v743, %v739
    %v992 = vpack.c.b16 %v748, %v744
    %v993 = vpack.c.b16 %v749, %v745
    %v994 = vpack.c.b16 %v750, %v746
    %v995 = vpack.c.b16 %v751, %v747
    %v996 = vpack.c.b16 %v756, %v752
    %v997 = vpack.c.b16 %v757, %v753
    %v998 = vpack.c.b16 %v758, %v754
    %v999 = vpack.c.b16 %v759, %v755
    %v1000 = vpack.c.b16 %v764, %v760
    %v1001 = vpack.c.b16 %v765, %v761
    %v1002 = vpack.c.b16 %v766, %v762
    %v1003 = vpack.c.b16 %v767, %v763
    %v1004 = vpack.c.b16 %v772, %v768
    %v1005 = vpack.c.b16 %v773, %v769
    %v1006 = vpack.c.b16 %v774, %v770
    %v1007 = vpack.c.b16 %v775, %v771
    %v1008 = vpack.c.b16 %v780, %v776
    %v1009 = vpack.c.b16 %v781, %v777
    %v1010 = vpack.c.b16 %v782, %v778
    %v1011 = vpack.c.b16 %v783, %v779
    %v1012 = vpack.c.b16 %v788, %v784
    %v1013 = vpack.c.b16 %v789, %v785
    %v1014 = vpack.c.b16 %v790, %v786
    %v1015 = vpack.c.b16 %v791, %v787
    %v1016 = vpack.c.b16 %v796, %v792
    %v1017 = vpack.c.b16 %v797, %v793
    %v1018 = vpack.c.b16 %v798, %v794
    %v1019 = vpack.c.b16 %v799, %v795
    %v1020 = vpack.c.b16 %v804, %v800
    %v1021 = vpack.c.b16 %v805, %v801
    %v1022 = vpack.c.b16 %v806, %v802
    %v1023 = vpack.c.b16 %v807, %v803
    %v1024 = vpack.c.b16 %v812, %v808
    %v1025 = vpack.c.b16 %v813, %v809
    %v1026 = vpack.c.b16 %v814, %v810
    %v1027 = vpack.c.b16 %v815, %v811
    %v1028 = vpack.c.b16 %v820, %v816
    %v1029 = vpack.c.b16 %v821, %v817
    %v1030 = vpack.c.b16 %v822, %v818
    %v1031 = vpack.c.b16 %v823, %v819
    %v1032 = vpack.c.b16 %v828, %v824
    %v1033 = vpack.c.b16 %v829, %v825
    %v1034 = vpack.c.b16 %v830, %v826
    %v1035 = vpack.c.b16 %v831, %v827
    %v1036 = vpack.c.b16 %v836, %v832
    %v1037 = vpack.c.b16 %v837, %v833
    %v1038 = vpack.c.b16 %v838, %v834
    %v1039 = vpack.c.b16 %v839, %v835
    %v1040 = vpack.c.b16 %v844, %v840
    %v1041 = vpack.c.b16 %v845, %v841
    %v1042 = vpack.c.b16 %v846, %v842
    %v1043 = vpack.c.b16 %v847, %v843
    %v1044 = vpack.c.b16 %v852, %v848
    %v1045 = vpack.c.b16 %v853, %v849
    %v1046 = vpack.c.b16 %v854, %v850
    %v1047 = vpack.c.b16 %v855, %v851
    %v1048 = vpack.c.b16 %v860, %v856
    %v1049 = vpack.c.b16 %v861, %v857
    %v1050 = vpack.c.b16 %v862, %v858
    %v1051 = vpack.c.b16 %v863, %v859
    %v1052 = vpack.c.b16 %v868, %v864
    %v1053 = vpack.c.b16 %v869, %v865
    %v1054 = vpack.c.b16 %v870, %v866
    %v1055 = vpack.c.b16 %v871, %v867
    %v1056 = vpack.c.b16 %v876, %v872
    %v1057 = vpack.c.b16 %v877, %v873
    %v1058 = vpack.c.b16 %v878, %v874
    %v1059 = vpack.c.b16 %v879, %v875
    %v1060 = vpack.c.b16 %v884, %v880
    %v1061 = vpack.c.b16 %v885, %v881
    %v1062 = vpack.c.b16 %v886, %v882
    %v1063 = vpack.c.b16 %v887, %v883
    %v1064 = vpack.c.b16 %v892, %v888
    %v1065 = vpack.c.b16 %v893, %v889
    %v1066 = vpack.c.b16 %v894, %v890
    %v1067 = vpack.c.b16 %v895, %v891
    %v1068 = vpack.c.b16 %v900, %v896
    %v1069 = vpack.c.b16 %v901, %v897
    %v1070 = vpack.c.b16 %v902, %v898
    %v1071 = vpack.c.b16 %v903, %v899
    %v1072 = vpack.c.b16 %v908, %v904
    %v1073 = vpack.c.b16 %v909, %v905
    %v1074 = vpack.c.b16 %v910, %v906
    %v1075 = vpack.c.b16 %v911, %v907
    %v1076 = vpack.c.b16 %v916, %v912
    %v1077 = vpack.c.b16 %v917, %v913
    %v1078 = vpack.c.b16 %v918, %v914
    %v1079 = vpack.c.b16 %v919, %v915
    %v1080 = vpack.c.b16 %v924, %v920
    %v1081 = vpack.c.b16 %v925, %v921
    %v1082 = vpack.c.b16 %v926, %v922
    %v1083 = vpack.c.b16 %v927, %v923
    %v1084 = vpack.c.b16 %v932, %v928
    %v1085 = vpack.c.b16 %v933, %v929
    %v1086 = vpack.c.b16 %v934, %v930
    %v1087 = vpack.c.b16 %v935, %v931
    %v1088 = vpack.c.b16 %v940, %v936
    %v1089 = vpack.c.b16 %v941, %v937
    %v1090 = vpack.c.b16 %v942, %v938
    %v1091 = vpack.c.b16 %v943, %v939
    %v1092 = vpack.c.b16 %v948, %v944
    %v1093 = vpack.c.b16 %v949, %v945
    %v1094 = vpack.c.b16 %v950, %v946
    %v1095 = vpack.c.b16 %v951, %v947
    %v1096 = vpack.c.b16 %v956, %v952
    %v1097 = vpack.c.b16 %v957, %v953
    %v1098 = vpack.c.b16 %v958, %v954
    %v1099 = vpack.c.b16 %v959, %v955
    %v1100 = vpack.c.b16 %v964, %v960
    %v1101 = vpack.c.b16 %v965, %v961
    %v1102 = vpack.c.b16 %v966, %v962
    %v1103 = vpack.c.b16 %v967, %v963
    %v1104 = vpack.c.b16 %v972, %v968
    %v1105 = vpack.c.b16 %v973, %v969
    %v1106 = vpack.c.b16 %v974, %v970
    %v1107 = vpack.c.b16 %v975, %v971
    %v1108 = vpack.c.b16 %v980, %v976
    %v1109 = vpack.c.b16 %v981, %v977
    %v1110 = vpack.c.b16 %v982, %v978
    %v1111 = vpack.c.b16 %v983, %v979
    %1240 = vmatprep.subr.bf16.mxu0 %v1013
    %1241 = vmatpush1.bf16.msra.mxu0 %v1012
    %1242 = vmatprep.subr.bf16.mxu0 %v1009
    %1243 = vmatpush1.bf16.msra.mxu0 %v1008
    %1244 = vmatprep.subr.bf16.mxu0 %v1005
    %1245 = vmatpush1.bf16.msra.mxu0 %v1004
    %1246 = vmatprep.subr.bf16.mxu0 %v1001
    %1247 = vmatpush1.bf16.msra.mxu0 %v1000
    %1248 = vmatprep.subr.bf16.mxu0 %v997
    %1249 = vmatpush1.bf16.msra.mxu0 %v996
    %1250 = vmatprep.subr.bf16.mxu0 %v993
    %1251 = vmatpush1.bf16.msra.mxu0 %v992
    %1252 = vmatprep.subr.bf16.mxu0 %v989
    %1253 = vmatpush1.bf16.msra.mxu0 %v988
    %1254 = vmatprep.subr.bf16.mxu0 %v985
    %1255 = vmatpush1.bf16.msra.mxu0 %v984
    %1256 = vmatprep.subr.bf16.mxu0 %v1045
    %1257 = vmatpush2.bf16.msra.mxu0 %v1044
    %1258 = vmatprep.subr.bf16.mxu0 %v1041
    %1259 = vmatpush2.bf16.msra.mxu0 %v1040
    %1260 = vmatprep.subr.bf16.mxu0 %v1037
    %1261 = vmatpush2.bf16.msra.mxu0 %v1036
    %1262 = vmatprep.subr.bf16.mxu0 %v1033
    %1263 = vmatpush2.bf16.msra.mxu0 %v1032
    %1264 = vmatprep.subr.bf16.mxu0 %v1029
    %1265 = vmatpush2.bf16.msra.mxu0 %v1028
    %1266 = vmatprep.subr.bf16.mxu0 %v1025
    %1267 = vmatpush2.bf16.msra.mxu0 %v1024
    %1268 = vmatprep.subr.bf16.mxu0 %v1021
    %1269 = vmatpush2.bf16.msra.mxu0 %v1020
    %1270 = vmatprep.subr.bf16.mxu0 %v1017
    %1271 = vmatpush2.bf16.msra.mxu0 %v1016
    %1272 = vmatprep.mubr.bf16.mxu0 %v447
    %1273 = vmatmul.mubr.bf16.gmra.mxu0 %v446
    %v1274 = vpop.f32.mrf.mxu0
    %v1275 = vadd.f32 %v583, %v1274
    %v1276 = vpop.f32.mrf.mxu0
    %v1277 = vadd.f32 %v587, %v1276
    %v1278 = vpop.f32.mrf.mxu0
    %v1279 = vadd.f32 %v583, %v1278
    %v1280 = vpop.f32.mrf.mxu0
    %v1281 = vadd.f32 %v587, %v1280
    %1282 = vdwg.mxu0
    %1283 = vmatprep.subr.bf16.mxu0 %v1077
    %1284 = vmatpush1.bf16.msra.mxu0 %v1076
    %1285 = vmatprep.subr.bf16.mxu0 %v1073
    %1286 = vmatpush1.bf16.msra.mxu0 %v1072
    %1287 = vmatprep.subr.bf16.mxu0 %v1069
    %1288 = vmatpush1.bf16.msra.mxu0 %v1068
    %1289 = vmatprep.subr.bf16.mxu0 %v1065
    %1290 = vmatpush1.bf16.msra.mxu0 %v1064
    %1291 = vmatprep.subr.bf16.mxu0 %v1061
    %1292 = vmatpush1.bf16.msra.mxu0 %v1060
    %1293 = vmatprep.subr.bf16.mxu0 %v1057
    %1294 = vmatpush1.bf16.msra.mxu0 %v1056
    %1295 = vmatprep.subr.bf16.mxu0 %v1053
    %1296 = vmatpush1.bf16.msra.mxu0 %v1052
    %1297 = vmatprep.subr.bf16.mxu0 %v1049
    %1298 = vmatpush1.bf16.msra.mxu0 %v1048
    %1299 = vmatprep.subr.bf16.mxu0 %v1109
    %1300 = vmatpush2.bf16.msra.mxu0 %v1108
    %1301 = vmatprep.subr.bf16.mxu0 %v1105
    %1302 = vmatpush2.bf16.msra.mxu0 %v1104
    %1303 = vmatprep.subr.bf16.mxu0 %v1101
    %1304 = vmatpush2.bf16.msra.mxu0 %v1100
    %1305 = vmatprep.subr.bf16.mxu0 %v1097
    %1306 = vmatpush2.bf16.msra.mxu0 %v1096
    %1307 = vmatprep.subr.bf16.mxu0 %v1093
    %1308 = vmatpush2.bf16.msra.mxu0 %v1092
    %1309 = vmatprep.subr.bf16.mxu0 %v1089
    %1310 = vmatpush2.bf16.msra.mxu0 %v1088
    %1311 = vmatprep.subr.bf16.mxu0 %v1085
    %1312 = vmatpush2.bf16.msra.mxu0 %v1084
    %1313 = vmatprep.subr.bf16.mxu0 %v1081
    %1314 = vmatpush2.bf16.msra.mxu0 %v1080
    %1315 = vmatprep.mubr.bf16.mxu0 %v449
    %1316 = vmatmul.mubr.bf16.gmra.mxu0 %v448
    %v1317 = vpop.f32.mrf.mxu0
    %v1318 = vadd.f32 %v1275, %v1317
    %v1319 = vpop.f32.mrf.mxu0
    %v1320 = vadd.f32 %v1277, %v1319
    %v1321 = vpop.f32.mrf.mxu0
    %v1322 = vadd.f32 %v1279, %v1321
    %v1323 = vpop.f32.mrf.mxu0
    %v1324 = vadd.f32 %v1281, %v1323
    %1325 = vdwg.mxu0
    %1326 = vmatprep.subr.bf16.mxu0 %v1015
    %1327 = vmatpush1.bf16.msra.mxu0 %v1014
    %1328 = vmatprep.subr.bf16.mxu0 %v1011
    %1329 = vmatpush1.bf16.msra.mxu0 %v1010
    %1330 = vmatprep.subr.bf16.mxu0 %v1007
    %1331 = vmatpush1.bf16.msra.mxu0 %v1006
    %1332 = vmatprep.subr.bf16.mxu0 %v1003
    %1333 = vmatpush1.bf16.msra.mxu0 %v1002
    %1334 = vmatprep.subr.bf16.mxu0 %v999
    %1335 = vmatpush1.bf16.msra.mxu0 %v998
    %1336 = vmatprep.subr.bf16.mxu0 %v995
    %1337 = vmatpush1.bf16.msra.mxu0 %v994
    %1338 = vmatprep.subr.bf16.mxu0 %v991
    %1339 = vmatpush1.bf16.msra.mxu0 %v990
    %1340 = vmatprep.subr.bf16.mxu0 %v987
    %1341 = vmatpush1.bf16.msra.mxu0 %v986
    %1342 = vmatprep.subr.bf16.mxu0 %v1047
    %1343 = vmatpush2.bf16.msra.mxu0 %v1046
    %1344 = vmatprep.subr.bf16.mxu0 %v1043
    %1345 = vmatpush2.bf16.msra.mxu0 %v1042
    %1346 = vmatprep.subr.bf16.mxu0 %v1039
    %1347 = vmatpush2.bf16.msra.mxu0 %v1038
    %1348 = vmatprep.subr.bf16.mxu0 %v1035
    %1349 = vmatpush2.bf16.msra.mxu0 %v1034
    %1350 = vmatprep.subr.bf16.mxu0 %v1031
    %1351 = vmatpush2.bf16.msra.mxu0 %v1030
    %1352 = vmatprep.subr.bf16.mxu0 %v1027
    %1353 = vmatpush2.bf16.msra.mxu0 %v1026
    %1354 = vmatprep.subr.bf16.mxu0 %v1023
    %1355 = vmatpush2.bf16.msra.mxu0 %v1022
    %1356 = vmatprep.subr.bf16.mxu0 %v1019
    %1357 = vmatpush2.bf16.msra.mxu0 %v1018
    %1358 = vmatprep.mubr.bf16.mxu0 %v447
    %1359 = vmatmul.mubr.bf16.gmra.mxu0 %v446
    %v1360 = vpop.f32.mrf.mxu0
    %v1361 = vadd.f32 %v591, %v1360
    %v1362 = vpop.f32.mrf.mxu0
    %v1363 = vadd.f32 %v595, %v1362
    %v1364 = vpop.f32.mrf.mxu0
    %v1365 = vadd.f32 %v591, %v1364
    %v1366 = vpop.f32.mrf.mxu0
    %v1367 = vadd.f32 %v595, %v1366
    %1368 = vdwg.mxu0
    %1369 = vmatprep.subr.bf16.mxu0 %v1079
    %1370 = vmatpush1.bf16.msra.mxu0 %v1078
    %1371 = vmatprep.subr.bf16.mxu0 %v1075
    %1372 = vmatpush1.bf16.msra.mxu0 %v1074
    %1373 = vmatprep.subr.bf16.mxu0 %v1071
    %1374 = vmatpush1.bf16.msra.mxu0 %v1070
    %1375 = vmatprep.subr.bf16.mxu0 %v1067
    %1376 = vmatpush1.bf16.msra.mxu0 %v1066
    %1377 = vmatprep.subr.bf16.mxu0 %v1063
    %1378 = vmatpush1.bf16.msra.mxu0 %v1062
    %1379 = vmatprep.subr.bf16.mxu0 %v1059
    %1380 = vmatpush1.bf16.msra.mxu0 %v1058
    %1381 = vmatprep.subr.bf16.mxu0 %v1055
    %1382 = vmatpush1.bf16.msra.mxu0 %v1054
    %1383 = vmatprep.subr.bf16.mxu0 %v1051
    %1384 = vmatpush1.bf16.msra.mxu0 %v1050
    %1385 = vmatprep.subr.bf16.mxu0 %v1111
    %1386 = vmatpush2.bf16.msra.mxu0 %v1110
    %1387 = vmatprep.subr.bf16.mxu0 %v1107
    %1388 = vmatpush2.bf16.msra.mxu0 %v1106
    %1389 = vmatprep.subr.bf16.mxu0 %v1103
    %1390 = vmatpush2.bf16.msra.mxu0 %v1102
    %1391 = vmatprep.subr.bf16.mxu0 %v1099
    %1392 = vmatpush2.bf16.msra.mxu0 %v1098
    %1393 = vmatprep.subr.bf16.mxu0 %v1095
    %1394 = vmatpush2.bf16.msra.mxu0 %v1094
    %1395 = vmatprep.subr.bf16.mxu0 %v1091
    %1396 = vmatpush2.bf16.msra.mxu0 %v1090
    %1397 = vmatprep.subr.bf16.mxu0 %v1087
    %1398 = vmatpush2.bf16.msra.mxu0 %v1086
    %1399 = vmatprep.subr.bf16.mxu0 %v1083
    %1400 = vmatpush2.bf16.msra.mxu0 %v1082
    %1401 = vmatprep.mubr.bf16.mxu0 %v449
    %1402 = vmatmul.mubr.bf16.gmra.mxu0 %v448
    %v1403 = vpop.f32.mrf.mxu0
    %v1404 = vadd.f32 %v1361, %v1403
    %v1405 = vpop.f32.mrf.mxu0
    %v1406 = vadd.f32 %v1363, %v1405
    %v1407 = vpop.f32.mrf.mxu0
    %v1408 = vadd.f32 %v1365, %v1407
    %v1409 = vpop.f32.mrf.mxu0
    %v1410 = vadd.f32 %v1367, %v1409
    %1411 = vdwg.mxu0
    %vm1412 = vcmp.gt.f32.partialorder %v1318, 0.0
    %vm1413 = vcmp.gt.f32.partialorder %v1320, 0.0
    %vm1414 = vcmp.gt.f32.partialorder %v1404, 0.0
    %vm1415 = vcmp.gt.f32.partialorder %v1406, 0.0
    %vm1416 = vcmp.gt.f32.partialorder %v1322, 0.0
    %vm1417 = vcmp.gt.f32.partialorder %v1324, 0.0
    %vm1418 = vcmp.gt.f32.partialorder %v1408, 0.0
    %vm1419 = vcmp.gt.f32.partialorder %v1410, 0.0
    %v1420 = vmul.f32 %v1318, 0.01
    %v1421 = vmul.f32 %v1320, 0.01
    %v1422 = vmul.f32 %v1404, 0.01
    %v1423 = vmul.f32 %v1406, 0.01
    %v1424 = vmul.f32 %v1322, 0.01
    %v1425 = vmul.f32 %v1324, 0.01
    %v1426 = vmul.f32 %v1408, 0.01
    %v1427 = vmul.f32 %v1410, 0.01
    %v1428 = vsel %vm1412, %v1318, %v1420
    %v1429 = vsel %vm1413, %v1320, %v1421
    %v1430 = vsel %vm1414, %v1404, %v1422
    %v1431 = vsel %vm1415, %v1406, %v1423
    %v1432 = vsel %vm1416, %v1322, %v1424
    %v1433 = vsel %vm1417, %v1324, %v1425
    %v1434 = vsel %vm1418, %v1408, %v1426
    %v1435 = vsel %vm1419, %v1410, %v1427
    %v1436 = vpack.c.bf16 %v1432, %v1428
    %v1437 = vpack.c.bf16 %v1433, %v1429
    %v1438 = vpack.c.bf16 %v1434, %v1430
    %v1439 = vpack.c.bf16 %v1435, %v1431
    %v1440 = vld [vmem:[#allocation10] sm:$0xff]
    %v1441 = vld [vmem:[#allocation10 + $0x8] sm:$0xff]
    %v1442 = vld [vmem:[#allocation10 + $0x10] sm:$0xff]
    %v1443 = vld [vmem:[#allocation10 + $0x18] sm:$0xff]
    %v1444 = vld [vmem:[#allocation10 + $0x20] sm:$0xff]
    %v1445 = vld [vmem:[#allocation10 + $0x28] sm:$0xff]
    %v1446 = vld [vmem:[#allocation10 + $0x30] sm:$0xff]
    %v1447 = vld [vmem:[#allocation10 + $0x38] sm:$0xff]
    %v1448 = vld [vmem:[#allocation10 + $0x40] sm:$0xff]
    %v1449 = vld [vmem:[#allocation10 + $0x48] sm:$0xff]
    %v1450 = vld [vmem:[#allocation10 + $0x50] sm:$0xff]
    %v1451 = vld [vmem:[#allocation10 + $0x58] sm:$0xff]
    %v1452 = vld [vmem:[#allocation10 + $0x60] sm:$0xff]
    %v1453 = vld [vmem:[#allocation10 + $0x68] sm:$0xff]
    %v1454 = vld [vmem:[#allocation10 + $0x70] sm:$0xff]
    %v1455 = vld [vmem:[#allocation10 + $0x78] sm:$0xff]
    %v1456 = vld [vmem:[#allocation10 + $0x80] sm:$0xff]
    %v1457 = vld [vmem:[#allocation10 + $0x88] sm:$0xff]
    %v1458 = vld [vmem:[#allocation10 + $0x90] sm:$0xff]
    %v1459 = vld [vmem:[#allocation10 + $0x98] sm:$0xff]
    %v1460 = vld [vmem:[#allocation10 + $0xa0] sm:$0xff]
    %v1461 = vld [vmem:[#allocation10 + $0xa8] sm:$0xff]
    %v1462 = vld [vmem:[#allocation10 + $0xb0] sm:$0xff]
    %v1463 = vld [vmem:[#allocation10 + $0xb8] sm:$0xff]
    %v1464 = vld [vmem:[#allocation10 + $0xc0] sm:$0xff]
    %v1465 = vld [vmem:[#allocation10 + $0xc8] sm:$0xff]
    %v1466 = vld [vmem:[#allocation10 + $0xd0] sm:$0xff]
    %v1467 = vld [vmem:[#allocation10 + $0xd8] sm:$0xff]
    %v1468 = vld [vmem:[#allocation10 + $0xe0] sm:$0xff]
    %v1469 = vld [vmem:[#allocation10 + $0xe8] sm:$0xff]
    %v1470 = vld [vmem:[#allocation10 + $0xf0] sm:$0xff]
    %v1471 = vld [vmem:[#allocation10 + $0xf8] sm:$0xff]
    %v1472 = vld [vmem:[#allocation10 + $0x100] sm:$0xff]
    %v1473 = vld [vmem:[#allocation10 + $0x108] sm:$0xff]
    %v1474 = vld [vmem:[#allocation10 + $0x110] sm:$0xff]
    %v1475 = vld [vmem:[#allocation10 + $0x118] sm:$0xff]
    %v1476 = vld [vmem:[#allocation10 + $0x120] sm:$0xff]
    %v1477 = vld [vmem:[#allocation10 + $0x128] sm:$0xff]
    %v1478 = vld [vmem:[#allocation10 + $0x130] sm:$0xff]
    %v1479 = vld [vmem:[#allocation10 + $0x138] sm:$0xff]
    %v1480 = vld [vmem:[#allocation10 + $0x140] sm:$0xff]
    %v1481 = vld [vmem:[#allocation10 + $0x148] sm:$0xff]
    %v1482 = vld [vmem:[#allocation10 + $0x150] sm:$0xff]
    %v1483 = vld [vmem:[#allocation10 + $0x158] sm:$0xff]
    %v1484 = vld [vmem:[#allocation10 + $0x160] sm:$0xff]
    %v1485 = vld [vmem:[#allocation10 + $0x168] sm:$0xff]
    %v1486 = vld [vmem:[#allocation10 + $0x170] sm:$0xff]
    %v1487 = vld [vmem:[#allocation10 + $0x178] sm:$0xff]
    %v1488 = vld [vmem:[#allocation10 + $0x180] sm:$0xff]
    %v1489 = vld [vmem:[#allocation10 + $0x188] sm:$0xff]
    %v1490 = vld [vmem:[#allocation10 + $0x190] sm:$0xff]
    %v1491 = vld [vmem:[#allocation10 + $0x198] sm:$0xff]
    %v1492 = vld [vmem:[#allocation10 + $0x1a0] sm:$0xff]
    %v1493 = vld [vmem:[#allocation10 + $0x1a8] sm:$0xff]
    %v1494 = vld [vmem:[#allocation10 + $0x1b0] sm:$0xff]
    %v1495 = vld [vmem:[#allocation10 + $0x1b8] sm:$0xff]
    %v1496 = vld [vmem:[#allocation10 + $0x1c0] sm:$0xff]
    %v1497 = vld [vmem:[#allocation10 + $0x1c8] sm:$0xff]
    %v1498 = vld [vmem:[#allocation10 + $0x1d0] sm:$0xff]
    %v1499 = vld [vmem:[#allocation10 + $0x1d8] sm:$0xff]
    %v1500 = vld [vmem:[#allocation10 + $0x1e0] sm:$0xff]
    %v1501 = vld [vmem:[#allocation10 + $0x1e8] sm:$0xff]
    %v1502 = vld [vmem:[#allocation10 + $0x1f0] sm:$0xff]
    %v1503 = vld [vmem:[#allocation10 + $0x1f8] sm:$0xff]
    %v1504 = vld [vmem:[#allocation10 + $0x200] sm:$0xff]
    %v1505 = vld [vmem:[#allocation10 + $0x208] sm:$0xff]
    %v1506 = vld [vmem:[#allocation10 + $0x210] sm:$0xff]
    %v1507 = vld [vmem:[#allocation10 + $0x218] sm:$0xff]
    %v1508 = vld [vmem:[#allocation10 + $0x220] sm:$0xff]
    %v1509 = vld [vmem:[#allocation10 + $0x228] sm:$0xff]
    %v1510 = vld [vmem:[#allocation10 + $0x230] sm:$0xff]
    %v1511 = vld [vmem:[#allocation10 + $0x238] sm:$0xff]
    %v1512 = vld [vmem:[#allocation10 + $0x240] sm:$0xff]
    %v1513 = vld [vmem:[#allocation10 + $0x248] sm:$0xff]
    %v1514 = vld [vmem:[#allocation10 + $0x250] sm:$0xff]
    %v1515 = vld [vmem:[#allocation10 + $0x258] sm:$0xff]
    %v1516 = vld [vmem:[#allocation10 + $0x260] sm:$0xff]
    %v1517 = vld [vmem:[#allocation10 + $0x268] sm:$0xff]
    %v1518 = vld [vmem:[#allocation10 + $0x270] sm:$0xff]
    %v1519 = vld [vmem:[#allocation10 + $0x278] sm:$0xff]
    %v1520 = vld [vmem:[#allocation10 + $0x280] sm:$0xff]
    %v1521 = vld [vmem:[#allocation10 + $0x288] sm:$0xff]
    %v1522 = vld [vmem:[#allocation10 + $0x290] sm:$0xff]
    %v1523 = vld [vmem:[#allocation10 + $0x298] sm:$0xff]
    %v1524 = vld [vmem:[#allocation10 + $0x2a0] sm:$0xff]
    %v1525 = vld [vmem:[#allocation10 + $0x2a8] sm:$0xff]
    %v1526 = vld [vmem:[#allocation10 + $0x2b0] sm:$0xff]
    %v1527 = vld [vmem:[#allocation10 + $0x2b8] sm:$0xff]
    %v1528 = vld [vmem:[#allocation10 + $0x2c0] sm:$0xff]
    %v1529 = vld [vmem:[#allocation10 + $0x2c8] sm:$0xff]
    %v1530 = vld [vmem:[#allocation10 + $0x2d0] sm:$0xff]
    %v1531 = vld [vmem:[#allocation10 + $0x2d8] sm:$0xff]
    %v1532 = vld [vmem:[#allocation10 + $0x2e0] sm:$0xff]
    %v1533 = vld [vmem:[#allocation10 + $0x2e8] sm:$0xff]
    %v1534 = vld [vmem:[#allocation10 + $0x2f0] sm:$0xff]
    %v1535 = vld [vmem:[#allocation10 + $0x2f8] sm:$0xff]
    %v1536 = vld [vmem:[#allocation10 + $0x300] sm:$0xff]
    %v1537 = vld [vmem:[#allocation10 + $0x308] sm:$0xff]
    %v1538 = vld [vmem:[#allocation10 + $0x310] sm:$0xff]
    %v1539 = vld [vmem:[#allocation10 + $0x318] sm:$0xff]
    %v1540 = vld [vmem:[#allocation10 + $0x320] sm:$0xff]
    %v1541 = vld [vmem:[#allocation10 + $0x328] sm:$0xff]
    %v1542 = vld [vmem:[#allocation10 + $0x330] sm:$0xff]
    %v1543 = vld [vmem:[#allocation10 + $0x338] sm:$0xff]
    %v1544 = vld [vmem:[#allocation10 + $0x340] sm:$0xff]
    %v1545 = vld [vmem:[#allocation10 + $0x348] sm:$0xff]
    %v1546 = vld [vmem:[#allocation10 + $0x350] sm:$0xff]
    %v1547 = vld [vmem:[#allocation10 + $0x358] sm:$0xff]
    %v1548 = vld [vmem:[#allocation10 + $0x360] sm:$0xff]
    %v1549 = vld [vmem:[#allocation10 + $0x368] sm:$0xff]
    %v1550 = vld [vmem:[#allocation10 + $0x370] sm:$0xff]
    %v1551 = vld [vmem:[#allocation10 + $0x378] sm:$0xff]
    %v1552 = vld [vmem:[#allocation10 + $0x380] sm:$0xff]
    %v1553 = vld [vmem:[#allocation10 + $0x388] sm:$0xff]
    %v1554 = vld [vmem:[#allocation10 + $0x390] sm:$0xff]
    %v1555 = vld [vmem:[#allocation10 + $0x398] sm:$0xff]
    %v1556 = vld [vmem:[#allocation10 + $0x3a0] sm:$0xff]
    %v1557 = vld [vmem:[#allocation10 + $0x3a8] sm:$0xff]
    %v1558 = vld [vmem:[#allocation10 + $0x3b0] sm:$0xff]
    %v1559 = vld [vmem:[#allocation10 + $0x3b8] sm:$0xff]
    %v1560 = vld [vmem:[#allocation10 + $0x3c0] sm:$0xff]
    %v1561 = vld [vmem:[#allocation10 + $0x3c8] sm:$0xff]
    %v1562 = vld [vmem:[#allocation10 + $0x3d0] sm:$0xff]
    %v1563 = vld [vmem:[#allocation10 + $0x3d8] sm:$0xff]
    %v1564 = vld [vmem:[#allocation10 + $0x3e0] sm:$0xff]
    %v1565 = vld [vmem:[#allocation10 + $0x3e8] sm:$0xff]
    %v1566 = vld [vmem:[#allocation10 + $0x3f0] sm:$0xff]
    %v1567 = vld [vmem:[#allocation10 + $0x3f8] sm:$0xff]
    %v1568 = vld [vmem:[%s6] sm:$0xf]
    %v1570 = vlaneseq
    %v1571 = vshrl.u32 %v1570, 7
    %v1572 = vsub.s32 0, %v1571
    %v1573 = vrot.slane %v1568, %v1572
    %v1574 = vlaneseq
    %v1575 = vshrl.u32 %v1574, 7
    %v1576 = vsub.s32 1, %v1575
    %v1577 = vrot.slane %v1568, %v1576
    %v1578 = vlaneseq
    %v1579 = vshrl.u32 %v1578, 7
    %v1580 = vsub.s32 2, %v1579
    %v1581 = vrot.slane %v1568, %v1580
    %v1582 = vlaneseq
    %v1583 = vshrl.u32 %v1582, 7
    %v1584 = vsub.s32 3, %v1583
    %v1585 = vrot.slane %v1568, %v1584
    %v1718 = vunpack.c.l.b16 %v1440
    %v1719 = vunpack.c.h.b16 %v1440
    %v1720 = vunpack.c.l.b16 %v1441
    %v1721 = vunpack.c.h.b16 %v1441
    %v1722 = vunpack.c.l.b16 %v1442
    %v1723 = vunpack.c.h.b16 %v1442
    %v1724 = vunpack.c.l.b16 %v1443
    %v1725 = vunpack.c.h.b16 %v1443
    %v1726 = vunpack.c.l.b16 %v1444
    %v1727 = vunpack.c.h.b16 %v1444
    %v1728 = vunpack.c.l.b16 %v1445
    %v1729 = vunpack.c.h.b16 %v1445
    %v1730 = vunpack.c.l.b16 %v1446
    %v1731 = vunpack.c.h.b16 %v1446
    %v1732 = vunpack.c.l.b16 %v1447
    %v1733 = vunpack.c.h.b16 %v1447
    %v1734 = vunpack.c.l.b16 %v1448
    %v1735 = vunpack.c.h.b16 %v1448
    %v1736 = vunpack.c.l.b16 %v1449
    %v1737 = vunpack.c.h.b16 %v1449
    %v1738 = vunpack.c.l.b16 %v1450
    %v1739 = vunpack.c.h.b16 %v1450
    %v1740 = vunpack.c.l.b16 %v1451
    %v1741 = vunpack.c.h.b16 %v1451
    %v1742 = vunpack.c.l.b16 %v1452
    %v1743 = vunpack.c.h.b16 %v1452
    %v1744 = vunpack.c.l.b16 %v1453
    %v1745 = vunpack.c.h.b16 %v1453
    %v1746 = vunpack.c.l.b16 %v1454
    %v1747 = vunpack.c.h.b16 %v1454
    %v1748 = vunpack.c.l.b16 %v1455
    %v1749 = vunpack.c.h.b16 %v1455
    %v1750 = vunpack.c.l.b16 %v1456
    %v1751 = vunpack.c.h.b16 %v1456
    %v1752 = vunpack.c.l.b16 %v1457
    %v1753 = vunpack.c.h.b16 %v1457
    %v1754 = vunpack.c.l.b16 %v1458
    %v1755 = vunpack.c.h.b16 %v1458
    %v1756 = vunpack.c.l.b16 %v1459
    %v1757 = vunpack.c.h.b16 %v1459
    %v1758 = vunpack.c.l.b16 %v1460
    %v1759 = vunpack.c.h.b16 %v1460
    %v1760 = vunpack.c.l.b16 %v1461
    %v1761 = vunpack.c.h.b16 %v1461
    %v1762 = vunpack.c.l.b16 %v1462
    %v1763 = vunpack.c.h.b16 %v1462
    %v1764 = vunpack.c.l.b16 %v1463
    %v1765 = vunpack.c.h.b16 %v1463
    %v1766 = vunpack.c.l.b16 %v1464
    %v1767 = vunpack.c.h.b16 %v1464
    %v1768 = vunpack.c.l.b16 %v1465
    %v1769 = vunpack.c.h.b16 %v1465
    %v1770 = vunpack.c.l.b16 %v1466
    %v1771 = vunpack.c.h.b16 %v1466
    %v1772 = vunpack.c.l.b16 %v1467
    %v1773 = vunpack.c.h.b16 %v1467
    %v1774 = vunpack.c.l.b16 %v1468
    %v1775 = vunpack.c.h.b16 %v1468
    %v1776 = vunpack.c.l.b16 %v1469
    %v1777 = vunpack.c.h.b16 %v1469
    %v1778 = vunpack.c.l.b16 %v1470
    %v1779 = vunpack.c.h.b16 %v1470
    %v1780 = vunpack.c.l.b16 %v1471
    %v1781 = vunpack.c.h.b16 %v1471
    %v1782 = vunpack.c.l.b16 %v1472
    %v1783 = vunpack.c.h.b16 %v1472
    %v1784 = vunpack.c.l.b16 %v1473
    %v1785 = vunpack.c.h.b16 %v1473
    %v1786 = vunpack.c.l.b16 %v1474
    %v1787 = vunpack.c.h.b16 %v1474
    %v1788 = vunpack.c.l.b16 %v1475
    %v1789 = vunpack.c.h.b16 %v1475
    %v1790 = vunpack.c.l.b16 %v1476
    %v1791 = vunpack.c.h.b16 %v1476
    %v1792 = vunpack.c.l.b16 %v1477
    %v1793 = vunpack.c.h.b16 %v1477
    %v1794 = vunpack.c.l.b16 %v1478
    %v1795 = vunpack.c.h.b16 %v1478
    %v1796 = vunpack.c.l.b16 %v1479
    %v1797 = vunpack.c.h.b16 %v1479
    %v1798 = vunpack.c.l.b16 %v1480
    %v1799 = vunpack.c.h.b16 %v1480
    %v1800 = vunpack.c.l.b16 %v1481
    %v1801 = vunpack.c.h.b16 %v1481
    %v1802 = vunpack.c.l.b16 %v1482
    %v1803 = vunpack.c.h.b16 %v1482
    %v1804 = vunpack.c.l.b16 %v1483
    %v1805 = vunpack.c.h.b16 %v1483
    %v1806 = vunpack.c.l.b16 %v1484
    %v1807 = vunpack.c.h.b16 %v1484
    %v1808 = vunpack.c.l.b16 %v1485
    %v1809 = vunpack.c.h.b16 %v1485
    %v1810 = vunpack.c.l.b16 %v1486
    %v1811 = vunpack.c.h.b16 %v1486
    %v1812 = vunpack.c.l.b16 %v1487
    %v1813 = vunpack.c.h.b16 %v1487
    %v1814 = vunpack.c.l.b16 %v1488
    %v1815 = vunpack.c.h.b16 %v1488
    %v1816 = vunpack.c.l.b16 %v1489
    %v1817 = vunpack.c.h.b16 %v1489
    %v1818 = vunpack.c.l.b16 %v1490
    %v1819 = vunpack.c.h.b16 %v1490
    %v1820 = vunpack.c.l.b16 %v1491
    %v1821 = vunpack.c.h.b16 %v1491
    %v1822 = vunpack.c.l.b16 %v1492
    %v1823 = vunpack.c.h.b16 %v1492
    %v1824 = vunpack.c.l.b16 %v1493
    %v1825 = vunpack.c.h.b16 %v1493
    %v1826 = vunpack.c.l.b16 %v1494
    %v1827 = vunpack.c.h.b16 %v1494
    %v1828 = vunpack.c.l.b16 %v1495
    %v1829 = vunpack.c.h.b16 %v1495
    %v1830 = vunpack.c.l.b16 %v1496
    %v1831 = vunpack.c.h.b16 %v1496
    %v1832 = vunpack.c.l.b16 %v1497
    %v1833 = vunpack.c.h.b16 %v1497
    %v1834 = vunpack.c.l.b16 %v1498
    %v1835 = vunpack.c.h.b16 %v1498
    %v1836 = vunpack.c.l.b16 %v1499
    %v1837 = vunpack.c.h.b16 %v1499
    %v1838 = vunpack.c.l.b16 %v1500
    %v1839 = vunpack.c.h.b16 %v1500
    %v1840 = vunpack.c.l.b16 %v1501
    %v1841 = vunpack.c.h.b16 %v1501
    %v1842 = vunpack.c.l.b16 %v1502
    %v1843 = vunpack.c.h.b16 %v1502
    %v1844 = vunpack.c.l.b16 %v1503
    %v1845 = vunpack.c.h.b16 %v1503
    %v1846 = vunpack.c.l.b16 %v1504
    %v1847 = vunpack.c.h.b16 %v1504
    %v1848 = vunpack.c.l.b16 %v1505
    %v1849 = vunpack.c.h.b16 %v1505
    %v1850 = vunpack.c.l.b16 %v1506
    %v1851 = vunpack.c.h.b16 %v1506
    %v1852 = vunpack.c.l.b16 %v1507
    %v1853 = vunpack.c.h.b16 %v1507
    %v1854 = vunpack.c.l.b16 %v1508
    %v1855 = vunpack.c.h.b16 %v1508
    %v1856 = vunpack.c.l.b16 %v1509
    %v1857 = vunpack.c.h.b16 %v1509
    %v1858 = vunpack.c.l.b16 %v1510
    %v1859 = vunpack.c.h.b16 %v1510
    %v1860 = vunpack.c.l.b16 %v1511
    %v1861 = vunpack.c.h.b16 %v1511
    %v1862 = vunpack.c.l.b16 %v1512
    %v1863 = vunpack.c.h.b16 %v1512
    %v1864 = vunpack.c.l.b16 %v1513
    %v1865 = vunpack.c.h.b16 %v1513
    %v1866 = vunpack.c.l.b16 %v1514
    %v1867 = vunpack.c.h.b16 %v1514
    %v1868 = vunpack.c.l.b16 %v1515
    %v1869 = vunpack.c.h.b16 %v1515
    %v1870 = vunpack.c.l.b16 %v1516
    %v1871 = vunpack.c.h.b16 %v1516
    %v1872 = vunpack.c.l.b16 %v1517
    %v1873 = vunpack.c.h.b16 %v1517
    %v1874 = vunpack.c.l.b16 %v1518
    %v1875 = vunpack.c.h.b16 %v1518
    %v1876 = vunpack.c.l.b16 %v1519
    %v1877 = vunpack.c.h.b16 %v1519
    %v1878 = vunpack.c.l.b16 %v1520
    %v1879 = vunpack.c.h.b16 %v1520
    %v1880 = vunpack.c.l.b16 %v1521
    %v1881 = vunpack.c.h.b16 %v1521
    %v1882 = vunpack.c.l.b16 %v1522
    %v1883 = vunpack.c.h.b16 %v1522
    %v1884 = vunpack.c.l.b16 %v1523
    %v1885 = vunpack.c.h.b16 %v1523
    %v1886 = vunpack.c.l.b16 %v1524
    %v1887 = vunpack.c.h.b16 %v1524
    %v1888 = vunpack.c.l.b16 %v1525
    %v1889 = vunpack.c.h.b16 %v1525
    %v1890 = vunpack.c.l.b16 %v1526
    %v1891 = vunpack.c.h.b16 %v1526
    %v1892 = vunpack.c.l.b16 %v1527
    %v1893 = vunpack.c.h.b16 %v1527
    %v1894 = vunpack.c.l.b16 %v1528
    %v1895 = vunpack.c.h.b16 %v1528
    %v1896 = vunpack.c.l.b16 %v1529
    %v1897 = vunpack.c.h.b16 %v1529
    %v1898 = vunpack.c.l.b16 %v1530
    %v1899 = vunpack.c.h.b16 %v1530
    %v1900 = vunpack.c.l.b16 %v1531
    %v1901 = vunpack.c.h.b16 %v1531
    %v1902 = vunpack.c.l.b16 %v1532
    %v1903 = vunpack.c.h.b16 %v1532
    %v1904 = vunpack.c.l.b16 %v1533
    %v1905 = vunpack.c.h.b16 %v1533
    %v1906 = vunpack.c.l.b16 %v1534
    %v1907 = vunpack.c.h.b16 %v1534
    %v1908 = vunpack.c.l.b16 %v1535
    %v1909 = vunpack.c.h.b16 %v1535
    %v1910 = vunpack.c.l.b16 %v1536
    %v1911 = vunpack.c.h.b16 %v1536
    %v1912 = vunpack.c.l.b16 %v1537
    %v1913 = vunpack.c.h.b16 %v1537
    %v1914 = vunpack.c.l.b16 %v1538
    %v1915 = vunpack.c.h.b16 %v1538
    %v1916 = vunpack.c.l.b16 %v1539
    %v1917 = vunpack.c.h.b16 %v1539
    %v1918 = vunpack.c.l.b16 %v1540
    %v1919 = vunpack.c.h.b16 %v1540
    %v1920 = vunpack.c.l.b16 %v1541
    %v1921 = vunpack.c.h.b16 %v1541
    %v1922 = vunpack.c.l.b16 %v1542
    %v1923 = vunpack.c.h.b16 %v1542
    %v1924 = vunpack.c.l.b16 %v1543
    %v1925 = vunpack.c.h.b16 %v1543
    %v1926 = vunpack.c.l.b16 %v1544
    %v1927 = vunpack.c.h.b16 %v1544
    %v1928 = vunpack.c.l.b16 %v1545
    %v1929 = vunpack.c.h.b16 %v1545
    %v1930 = vunpack.c.l.b16 %v1546
    %v1931 = vunpack.c.h.b16 %v1546
    %v1932 = vunpack.c.l.b16 %v1547
    %v1933 = vunpack.c.h.b16 %v1547
    %v1934 = vunpack.c.l.b16 %v1548
    %v1935 = vunpack.c.h.b16 %v1548
    %v1936 = vunpack.c.l.b16 %v1549
    %v1937 = vunpack.c.h.b16 %v1549
    %v1938 = vunpack.c.l.b16 %v1550
    %v1939 = vunpack.c.h.b16 %v1550
    %v1940 = vunpack.c.l.b16 %v1551
    %v1941 = vunpack.c.h.b16 %v1551
    %v1942 = vunpack.c.l.b16 %v1552
    %v1943 = vunpack.c.h.b16 %v1552
    %v1944 = vunpack.c.l.b16 %v1553
    %v1945 = vunpack.c.h.b16 %v1553
    %v1946 = vunpack.c.l.b16 %v1554
    %v1947 = vunpack.c.h.b16 %v1554
    %v1948 = vunpack.c.l.b16 %v1555
    %v1949 = vunpack.c.h.b16 %v1555
    %v1950 = vunpack.c.l.b16 %v1556
    %v1951 = vunpack.c.h.b16 %v1556
    %v1952 = vunpack.c.l.b16 %v1557
    %v1953 = vunpack.c.h.b16 %v1557
    %v1954 = vunpack.c.l.b16 %v1558
    %v1955 = vunpack.c.h.b16 %v1558
    %v1956 = vunpack.c.l.b16 %v1559
    %v1957 = vunpack.c.h.b16 %v1559
    %v1958 = vunpack.c.l.b16 %v1560
    %v1959 = vunpack.c.h.b16 %v1560
    %v1960 = vunpack.c.l.b16 %v1561
    %v1961 = vunpack.c.h.b16 %v1561
    %v1962 = vunpack.c.l.b16 %v1562
    %v1963 = vunpack.c.h.b16 %v1562
    %v1964 = vunpack.c.l.b16 %v1563
    %v1965 = vunpack.c.h.b16 %v1563
    %v1966 = vunpack.c.l.b16 %v1564
    %v1967 = vunpack.c.h.b16 %v1564
    %v1968 = vunpack.c.l.b16 %v1565
    %v1969 = vunpack.c.h.b16 %v1565
    %v1970 = vunpack.c.l.b16 %v1566
    %v1971 = vunpack.c.h.b16 %v1566
    %v1972 = vunpack.c.l.b16 %v1567
    %v1973 = vunpack.c.h.b16 %v1567
    %v1974 = vpack.c.b16 %v1722, %v1718
    %v1975 = vpack.c.b16 %v1723, %v1719
    %v1976 = vpack.c.b16 %v1724, %v1720
    %v1977 = vpack.c.b16 %v1725, %v1721
    %v1978 = vpack.c.b16 %v1730, %v1726
    %v1979 = vpack.c.b16 %v1731, %v1727
    %v1980 = vpack.c.b16 %v1732, %v1728
    %v1981 = vpack.c.b16 %v1733, %v1729
    %v1982 = vpack.c.b16 %v1738, %v1734
    %v1983 = vpack.c.b16 %v1739, %v1735
    %v1984 = vpack.c.b16 %v1740, %v1736
    %v1985 = vpack.c.b16 %v1741, %v1737
    %v1986 = vpack.c.b16 %v1746, %v1742
    %v1987 = vpack.c.b16 %v1747, %v1743
    %v1988 = vpack.c.b16 %v1748, %v1744
    %v1989 = vpack.c.b16 %v1749, %v1745
    %v1990 = vpack.c.b16 %v1754, %v1750
    %v1991 = vpack.c.b16 %v1755, %v1751
    %v1992 = vpack.c.b16 %v1756, %v1752
    %v1993 = vpack.c.b16 %v1757, %v1753
    %v1994 = vpack.c.b16 %v1762, %v1758
    %v1995 = vpack.c.b16 %v1763, %v1759
    %v1996 = vpack.c.b16 %v1764, %v1760
    %v1997 = vpack.c.b16 %v1765, %v1761
    %v1998 = vpack.c.b16 %v1770, %v1766
    %v1999 = vpack.c.b16 %v1771, %v1767
    %v2000 = vpack.c.b16 %v1772, %v1768
    %v2001 = vpack.c.b16 %v1773, %v1769
    %v2002 = vpack.c.b16 %v1778, %v1774
    %v2003 = vpack.c.b16 %v1779, %v1775
    %v2004 = vpack.c.b16 %v1780, %v1776
    %v2005 = vpack.c.b16 %v1781, %v1777
    %v2006 = vpack.c.b16 %v1786, %v1782
    %v2007 = vpack.c.b16 %v1787, %v1783
    %v2008 = vpack.c.b16 %v1788, %v1784
    %v2009 = vpack.c.b16 %v1789, %v1785
    %v2010 = vpack.c.b16 %v1794, %v1790
    %v2011 = vpack.c.b16 %v1795, %v1791
    %v2012 = vpack.c.b16 %v1796, %v1792
    %v2013 = vpack.c.b16 %v1797, %v1793
    %v2014 = vpack.c.b16 %v1802, %v1798
    %v2015 = vpack.c.b16 %v1803, %v1799
    %v2016 = vpack.c.b16 %v1804, %v1800
    %v2017 = vpack.c.b16 %v1805, %v1801
    %v2018 = vpack.c.b16 %v1810, %v1806
    %v2019 = vpack.c.b16 %v1811, %v1807
    %v2020 = vpack.c.b16 %v1812, %v1808
    %v2021 = vpack.c.b16 %v1813, %v1809
    %v2022 = vpack.c.b16 %v1818, %v1814
    %v2023 = vpack.c.b16 %v1819, %v1815
    %v2024 = vpack.c.b16 %v1820, %v1816
    %v2025 = vpack.c.b16 %v1821, %v1817
    %v2026 = vpack.c.b16 %v1826, %v1822
    %v2027 = vpack.c.b16 %v1827, %v1823
    %v2028 = vpack.c.b16 %v1828, %v1824
    %v2029 = vpack.c.b16 %v1829, %v1825
    %v2030 = vpack.c.b16 %v1834, %v1830
    %v2031 = vpack.c.b16 %v1835, %v1831
    %v2032 = vpack.c.b16 %v1836, %v1832
    %v2033 = vpack.c.b16 %v1837, %v1833
    %v2034 = vpack.c.b16 %v1842, %v1838
    %v2035 = vpack.c.b16 %v1843, %v1839
    %v2036 = vpack.c.b16 %v1844, %v1840
    %v2037 = vpack.c.b16 %v1845, %v1841
    %v2038 = vpack.c.b16 %v1850, %v1846
    %v2039 = vpack.c.b16 %v1851, %v1847
    %v2040 = vpack.c.b16 %v1852, %v1848
    %v2041 = vpack.c.b16 %v1853, %v1849
    %v2042 = vpack.c.b16 %v1858, %v1854
    %v2043 = vpack.c.b16 %v1859, %v1855
    %v2044 = vpack.c.b16 %v1860, %v1856
    %v2045 = vpack.c.b16 %v1861, %v1857
    %v2046 = vpack.c.b16 %v1866, %v1862
    %v2047 = vpack.c.b16 %v1867, %v1863
    %v2048 = vpack.c.b16 %v1868, %v1864
    %v2049 = vpack.c.b16 %v1869, %v1865
    %v2050 = vpack.c.b16 %v1874, %v1870
    %v2051 = vpack.c.b16 %v1875, %v1871
    %v2052 = vpack.c.b16 %v1876, %v1872
    %v2053 = vpack.c.b16 %v1877, %v1873
    %v2054 = vpack.c.b16 %v1882, %v1878
    %v2055 = vpack.c.b16 %v1883, %v1879
    %v2056 = vpack.c.b16 %v1884, %v1880
    %v2057 = vpack.c.b16 %v1885, %v1881
    %v2058 = vpack.c.b16 %v1890, %v1886
    %v2059 = vpack.c.b16 %v1891, %v1887
    %v2060 = vpack.c.b16 %v1892, %v1888
    %v2061 = vpack.c.b16 %v1893, %v1889
    %v2062 = vpack.c.b16 %v1898, %v1894
    %v2063 = vpack.c.b16 %v1899, %v1895
    %v2064 = vpack.c.b16 %v1900, %v1896
    %v2065 = vpack.c.b16 %v1901, %v1897
    %v2066 = vpack.c.b16 %v1906, %v1902
    %v2067 = vpack.c.b16 %v1907, %v1903
    %v2068 = vpack.c.b16 %v1908, %v1904
    %v2069 = vpack.c.b16 %v1909, %v1905
    %v2070 = vpack.c.b16 %v1914, %v1910
    %v2071 = vpack.c.b16 %v1915, %v1911
    %v2072 = vpack.c.b16 %v1916, %v1912
    %v2073 = vpack.c.b16 %v1917, %v1913
    %v2074 = vpack.c.b16 %v1922, %v1918
    %v2075 = vpack.c.b16 %v1923, %v1919
    %v2076 = vpack.c.b16 %v1924, %v1920
    %v2077 = vpack.c.b16 %v1925, %v1921
    %v2078 = vpack.c.b16 %v1930, %v1926
    %v2079 = vpack.c.b16 %v1931, %v1927
    %v2080 = vpack.c.b16 %v1932, %v1928
    %v2081 = vpack.c.b16 %v1933, %v1929
    %v2082 = vpack.c.b16 %v1938, %v1934
    %v2083 = vpack.c.b16 %v1939, %v1935
    %v2084 = vpack.c.b16 %v1940, %v1936
    %v2085 = vpack.c.b16 %v1941, %v1937
    %v2086 = vpack.c.b16 %v1946, %v1942
    %v2087 = vpack.c.b16 %v1947, %v1943
    %v2088 = vpack.c.b16 %v1948, %v1944
    %v2089 = vpack.c.b16 %v1949, %v1945
    %v2090 = vpack.c.b16 %v1954, %v1950
    %v2091 = vpack.c.b16 %v1955, %v1951
    %v2092 = vpack.c.b16 %v1956, %v1952
    %v2093 = vpack.c.b16 %v1957, %v1953
    %v2094 = vpack.c.b16 %v1962, %v1958
    %v2095 = vpack.c.b16 %v1963, %v1959
    %v2096 = vpack.c.b16 %v1964, %v1960
    %v2097 = vpack.c.b16 %v1965, %v1961
    %v2098 = vpack.c.b16 %v1970, %v1966
    %v2099 = vpack.c.b16 %v1971, %v1967
    %v2100 = vpack.c.b16 %v1972, %v1968
    %v2101 = vpack.c.b16 %v1973, %v1969
    %2230 = vmatprep.subr.bf16.mxu0 %v2003
    %2231 = vmatpush1.bf16.msra.mxu0 %v2002
    %2232 = vmatprep.subr.bf16.mxu0 %v1999
    %2233 = vmatpush1.bf16.msra.mxu0 %v1998
    %2234 = vmatprep.subr.bf16.mxu0 %v1995
    %2235 = vmatpush1.bf16.msra.mxu0 %v1994
    %2236 = vmatprep.subr.bf16.mxu0 %v1991
    %2237 = vmatpush1.bf16.msra.mxu0 %v1990
    %2238 = vmatprep.subr.bf16.mxu0 %v1987
    %2239 = vmatpush1.bf16.msra.mxu0 %v1986
    %2240 = vmatprep.subr.bf16.mxu0 %v1983
    %2241 = vmatpush1.bf16.msra.mxu0 %v1982
    %2242 = vmatprep.subr.bf16.mxu0 %v1979
    %2243 = vmatpush1.bf16.msra.mxu0 %v1978
    %2244 = vmatprep.subr.bf16.mxu0 %v1975
    %2245 = vmatpush1.bf16.msra.mxu0 %v1974
    %2246 = vmatprep.subr.bf16.mxu0 %v2035
    %2247 = vmatpush2.bf16.msra.mxu0 %v2034
    %2248 = vmatprep.subr.bf16.mxu0 %v2031
    %2249 = vmatpush2.bf16.msra.mxu0 %v2030
    %2250 = vmatprep.subr.bf16.mxu0 %v2027
    %2251 = vmatpush2.bf16.msra.mxu0 %v2026
    %2252 = vmatprep.subr.bf16.mxu0 %v2023
    %2253 = vmatpush2.bf16.msra.mxu0 %v2022
    %2254 = vmatprep.subr.bf16.mxu0 %v2019
    %2255 = vmatpush2.bf16.msra.mxu0 %v2018
    %2256 = vmatprep.subr.bf16.mxu0 %v2015
    %2257 = vmatpush2.bf16.msra.mxu0 %v2014
    %2258 = vmatprep.subr.bf16.mxu0 %v2011
    %2259 = vmatpush2.bf16.msra.mxu0 %v2010
    %2260 = vmatprep.subr.bf16.mxu0 %v2007
    %2261 = vmatpush2.bf16.msra.mxu0 %v2006
    %2262 = vmatprep.mubr.bf16.mxu0 %v1437
    %2263 = vmatmul.mubr.bf16.gmra.mxu0 %v1436
    %v2264 = vpop.f32.mrf.mxu0
    %v2265 = vadd.f32 %v1573, %v2264
    %v2266 = vpop.f32.mrf.mxu0
    %v2267 = vadd.f32 %v1577, %v2266
    %v2268 = vpop.f32.mrf.mxu0
    %v2269 = vadd.f32 %v1573, %v2268
    %v2270 = vpop.f32.mrf.mxu0
    %v2271 = vadd.f32 %v1577, %v2270
    %2272 = vdwg.mxu0
    %2273 = vmatprep.subr.bf16.mxu0 %v2067
    %2274 = vmatpush1.bf16.msra.mxu0 %v2066
    %2275 = vmatprep.subr.bf16.mxu0 %v2063
    %2276 = vmatpush1.bf16.msra.mxu0 %v2062
    %2277 = vmatprep.subr.bf16.mxu0 %v2059
    %2278 = vmatpush1.bf16.msra.mxu0 %v2058
    %2279 = vmatprep.subr.bf16.mxu0 %v2055
    %2280 = vmatpush1.bf16.msra.mxu0 %v2054
    %2281 = vmatprep.subr.bf16.mxu0 %v2051
    %2282 = vmatpush1.bf16.msra.mxu0 %v2050
    %2283 = vmatprep.subr.bf16.mxu0 %v2047
    %2284 = vmatpush1.bf16.msra.mxu0 %v2046
    %2285 = vmatprep.subr.bf16.mxu0 %v2043
    %2286 = vmatpush1.bf16.msra.mxu0 %v2042
    %2287 = vmatprep.subr.bf16.mxu0 %v2039
    %2288 = vmatpush1.bf16.msra.mxu0 %v2038
    %2289 = vmatprep.subr.bf16.mxu0 %v2099
    %2290 = vmatpush2.bf16.msra.mxu0 %v2098
    %2291 = vmatprep.subr.bf16.mxu0 %v2095
    %2292 = vmatpush2.bf16.msra.mxu0 %v2094
    %2293 = vmatprep.subr.bf16.mxu0 %v2091
    %2294 = vmatpush2.bf16.msra.mxu0 %v2090
    %2295 = vmatprep.subr.bf16.mxu0 %v2087
    %2296 = vmatpush2.bf16.msra.mxu0 %v2086
    %2297 = vmatprep.subr.bf16.mxu0 %v2083
    %2298 = vmatpush2.bf16.msra.mxu0 %v2082
    %2299 = vmatprep.subr.bf16.mxu0 %v2079
    %2300 = vmatpush2.bf16.msra.mxu0 %v2078
    %2301 = vmatprep.subr.bf16.mxu0 %v2075
    %2302 = vmatpush2.bf16.msra.mxu0 %v2074
    %2303 = vmatprep.subr.bf16.mxu0 %v2071
    %2304 = vmatpush2.bf16.msra.mxu0 %v2070
    %2305 = vmatprep.mubr.bf16.mxu0 %v1439
    %2306 = vmatmul.mubr.bf16.gmra.mxu0 %v1438
    %v2307 = vpop.f32.mrf.mxu0
    %v2308 = vadd.f32 %v2265, %v2307
    %v2309 = vpop.f32.mrf.mxu0
    %v2310 = vadd.f32 %v2267, %v2309
    %v2311 = vpop.f32.mrf.mxu0
    %v2312 = vadd.f32 %v2269, %v2311
    %v2313 = vpop.f32.mrf.mxu0
    %v2314 = vadd.f32 %v2271, %v2313
    %2315 = vdwg.mxu0
    %2316 = vmatprep.subr.bf16.mxu0 %v2005
    %2317 = vmatpush1.bf16.msra.mxu0 %v2004
    %2318 = vmatprep.subr.bf16.mxu0 %v2001
    %2319 = vmatpush1.bf16.msra.mxu0 %v2000
    %2320 = vmatprep.subr.bf16.mxu0 %v1997
    %2321 = vmatpush1.bf16.msra.mxu0 %v1996
    %2322 = vmatprep.subr.bf16.mxu0 %v1993
    %2323 = vmatpush1.bf16.msra.mxu0 %v1992
    %2324 = vmatprep.subr.bf16.mxu0 %v1989
    %2325 = vmatpush1.bf16.msra.mxu0 %v1988
    %2326 = vmatprep.subr.bf16.mxu0 %v1985
    %2327 = vmatpush1.bf16.msra.mxu0 %v1984
    %2328 = vmatprep.subr.bf16.mxu0 %v1981
    %2329 = vmatpush1.bf16.msra.mxu0 %v1980
    %2330 = vmatprep.subr.bf16.mxu0 %v1977
    %2331 = vmatpush1.bf16.msra.mxu0 %v1976
    %2332 = vmatprep.subr.bf16.mxu0 %v2037
    %2333 = vmatpush2.bf16.msra.mxu0 %v2036
    %2334 = vmatprep.subr.bf16.mxu0 %v2033
    %2335 = vmatpush2.bf16.msra.mxu0 %v2032
    %2336 = vmatprep.subr.bf16.mxu0 %v2029
    %2337 = vmatpush2.bf16.msra.mxu0 %v2028
    %2338 = vmatprep.subr.bf16.mxu0 %v2025
    %2339 = vmatpush2.bf16.msra.mxu0 %v2024
    %2340 = vmatprep.subr.bf16.mxu0 %v2021
    %2341 = vmatpush2.bf16.msra.mxu0 %v2020
    %2342 = vmatprep.subr.bf16.mxu0 %v2017
    %2343 = vmatpush2.bf16.msra.mxu0 %v2016
    %2344 = vmatprep.subr.bf16.mxu0 %v2013
    %2345 = vmatpush2.bf16.msra.mxu0 %v2012
    %2346 = vmatprep.subr.bf16.mxu0 %v2009
    %2347 = vmatpush2.bf16.msra.mxu0 %v2008
    %2348 = vmatprep.mubr.bf16.mxu0 %v1437
    %2349 = vmatmul.mubr.bf16.gmra.mxu0 %v1436
    %v2350 = vpop.f32.mrf.mxu0
    %v2351 = vadd.f32 %v1581, %v2350
    %v2352 = vpop.f32.mrf.mxu0
    %v2353 = vadd.f32 %v1585, %v2352
    %v2354 = vpop.f32.mrf.mxu0
    %v2355 = vadd.f32 %v1581, %v2354
    %v2356 = vpop.f32.mrf.mxu0
    %v2357 = vadd.f32 %v1585, %v2356
    %2358 = vdwg.mxu0
    %2359 = vmatprep.subr.bf16.mxu0 %v2069
    %2360 = vmatpush1.bf16.msra.mxu0 %v2068
    %2361 = vmatprep.subr.bf16.mxu0 %v2065
    %2362 = vmatpush1.bf16.msra.mxu0 %v2064
    %2363 = vmatprep.subr.bf16.mxu0 %v2061
    %2364 = vmatpush1.bf16.msra.mxu0 %v2060
    %2365 = vmatprep.subr.bf16.mxu0 %v2057
    %2366 = vmatpush1.bf16.msra.mxu0 %v2056
    %2367 = vmatprep.subr.bf16.mxu0 %v2053
    %2368 = vmatpush1.bf16.msra.mxu0 %v2052
    %2369 = vmatprep.subr.bf16.mxu0 %v2049
    %2370 = vmatpush1.bf16.msra.mxu0 %v2048
    %2371 = vmatprep.subr.bf16.mxu0 %v2045
    %2372 = vmatpush1.bf16.msra.mxu0 %v2044
    %2373 = vmatprep.subr.bf16.mxu0 %v2041
    %2374 = vmatpush1.bf16.msra.mxu0 %v2040
    %2375 = vmatprep.subr.bf16.mxu0 %v2101
    %2376 = vmatpush2.bf16.msra.mxu0 %v2100
    %2377 = vmatprep.subr.bf16.mxu0 %v2097
    %2378 = vmatpush2.bf16.msra.mxu0 %v2096
    %2379 = vmatprep.subr.bf16.mxu0 %v2093
    %2380 = vmatpush2.bf16.msra.mxu0 %v2092
    %2381 = vmatprep.subr.bf16.mxu0 %v2089
    %2382 = vmatpush2.bf16.msra.mxu0 %v2088
    %2383 = vmatprep.subr.bf16.mxu0 %v2085
    %2384 = vmatpush2.bf16.msra.mxu0 %v2084
    %2385 = vmatprep.subr.bf16.mxu0 %v2081
    %2386 = vmatpush2.bf16.msra.mxu0 %v2080
    %2387 = vmatprep.subr.bf16.mxu0 %v2077
    %2388 = vmatpush2.bf16.msra.mxu0 %v2076
    %2389 = vmatprep.subr.bf16.mxu0 %v2073
    %2390 = vmatpush2.bf16.msra.mxu0 %v2072
    %2391 = vmatprep.mubr.bf16.mxu0 %v1439
    %2392 = vmatmul.mubr.bf16.gmra.mxu0 %v1438
    %v2393 = vpop.f32.mrf.mxu0
    %v2394 = vadd.f32 %v2351, %v2393
    %v2395 = vpop.f32.mrf.mxu0
    %v2396 = vadd.f32 %v2353, %v2395
    %v2397 = vpop.f32.mrf.mxu0
    %v2398 = vadd.f32 %v2355, %v2397
    %v2399 = vpop.f32.mrf.mxu0
    %v2400 = vadd.f32 %v2357, %v2399
    %2401 = vdwg.mxu0
    %vm2402 = vcmp.gt.f32.partialorder %v2308, 0.0
    %vm2403 = vcmp.gt.f32.partialorder %v2310, 0.0
    %vm2404 = vcmp.gt.f32.partialorder %v2394, 0.0
    %vm2405 = vcmp.gt.f32.partialorder %v2396, 0.0
    %vm2406 = vcmp.gt.f32.partialorder %v2312, 0.0
    %vm2407 = vcmp.gt.f32.partialorder %v2314, 0.0
    %vm2408 = vcmp.gt.f32.partialorder %v2398, 0.0
    %vm2409 = vcmp.gt.f32.partialorder %v2400, 0.0
    %v2410 = vmul.f32 %v2308, 0.01
    %v2411 = vmul.f32 %v2310, 0.01
    %v2412 = vmul.f32 %v2394, 0.01
    %v2413 = vmul.f32 %v2396, 0.01
    %v2414 = vmul.f32 %v2312, 0.01
    %v2415 = vmul.f32 %v2314, 0.01
    %v2416 = vmul.f32 %v2398, 0.01
    %v2417 = vmul.f32 %v2400, 0.01
    %v2418 = vsel %vm2402, %v2308, %v2410
    %v2419 = vsel %vm2403, %v2310, %v2411
    %v2420 = vsel %vm2404, %v2394, %v2412
    %v2421 = vsel %vm2405, %v2396, %v2413
    %v2422 = vsel %vm2406, %v2312, %v2414
    %v2423 = vsel %vm2407, %v2314, %v2415
    %v2424 = vsel %vm2408, %v2398, %v2416
    %v2425 = vsel %vm2409, %v2400, %v2417
    %v2426 = vpack.c.bf16 %v2422, %v2418
    %v2427 = vpack.c.bf16 %v2423, %v2419
    %v2428 = vpack.c.bf16 %v2424, %v2420
    %v2429 = vpack.c.bf16 %v2425, %v2421
    %v2430 = vld [vmem:[#allocation11] sm:$0xf]
    %v2431 = vld [vmem:[#allocation11 + $0x4] sm:$0xf]
    %v2432 = vld [vmem:[#allocation11 + $0x8] sm:$0xf]
    %v2433 = vld [vmem:[#allocation11 + $0xc] sm:$0xf]
    %v2434 = vld [vmem:[#allocation11 + $0x10] sm:$0xf]
    %v2435 = vld [vmem:[#allocation11 + $0x14] sm:$0xf]
    %v2436 = vld [vmem:[#allocation11 + $0x18] sm:$0xf]
    %v2437 = vld [vmem:[#allocation11 + $0x1c] sm:$0xf]
    %v2438 = vld [vmem:[#allocation11 + $0x20] sm:$0xf]
    %v2439 = vld [vmem:[#allocation11 + $0x24] sm:$0xf]
    %v2440 = vld [vmem:[#allocation11 + $0x28] sm:$0xf]
    %v2441 = vld [vmem:[#allocation11 + $0x2c] sm:$0xf]
    %v2442 = vld [vmem:[#allocation11 + $0x30] sm:$0xf]
    %v2443 = vld [vmem:[#allocation11 + $0x34] sm:$0xf]
    %v2444 = vld [vmem:[#allocation11 + $0x38] sm:$0xf]
    %v2445 = vld [vmem:[#allocation11 + $0x3c] sm:$0xf]
    %v2446 = vld [vmem:[#allocation11 + $0x40] sm:$0xf]
    %v2447 = vld [vmem:[#allocation11 + $0x44] sm:$0xf]
    %v2448 = vld [vmem:[#allocation11 + $0x48] sm:$0xf]
    %v2449 = vld [vmem:[#allocation11 + $0x4c] sm:$0xf]
    %v2450 = vld [vmem:[#allocation11 + $0x50] sm:$0xf]
    %v2451 = vld [vmem:[#allocation11 + $0x54] sm:$0xf]
    %v2452 = vld [vmem:[#allocation11 + $0x58] sm:$0xf]
    %v2453 = vld [vmem:[#allocation11 + $0x5c] sm:$0xf]
    %v2454 = vld [vmem:[#allocation11 + $0x60] sm:$0xf]
    %v2455 = vld [vmem:[#allocation11 + $0x64] sm:$0xf]
    %v2456 = vld [vmem:[#allocation11 + $0x68] sm:$0xf]
    %v2457 = vld [vmem:[#allocation11 + $0x6c] sm:$0xf]
    %v2458 = vld [vmem:[#allocation11 + $0x70] sm:$0xf]
    %v2459 = vld [vmem:[#allocation11 + $0x74] sm:$0xf]
    %v2460 = vld [vmem:[#allocation11 + $0x78] sm:$0xf]
    %v2461 = vld [vmem:[#allocation11 + $0x7c] sm:$0xf]
    %v2462 = vld [vmem:[#allocation11 + $0x80] sm:$0xf]
    %v2463 = vld [vmem:[#allocation11 + $0x84] sm:$0xf]
    %v2464 = vld [vmem:[#allocation11 + $0x88] sm:$0xf]
    %v2465 = vld [vmem:[#allocation11 + $0x8c] sm:$0xf]
    %v2466 = vld [vmem:[#allocation11 + $0x90] sm:$0xf]
    %v2467 = vld [vmem:[#allocation11 + $0x94] sm:$0xf]
    %v2468 = vld [vmem:[#allocation11 + $0x98] sm:$0xf]
    %v2469 = vld [vmem:[#allocation11 + $0x9c] sm:$0xf]
    %v2470 = vld [vmem:[#allocation11 + $0xa0] sm:$0xf]
    %v2471 = vld [vmem:[#allocation11 + $0xa4] sm:$0xf]
    %v2472 = vld [vmem:[#allocation11 + $0xa8] sm:$0xf]
    %v2473 = vld [vmem:[#allocation11 + $0xac] sm:$0xf]
    %v2474 = vld [vmem:[#allocation11 + $0xb0] sm:$0xf]
    %v2475 = vld [vmem:[#allocation11 + $0xb4] sm:$0xf]
    %v2476 = vld [vmem:[#allocation11 + $0xb8] sm:$0xf]
    %v2477 = vld [vmem:[#allocation11 + $0xbc] sm:$0xf]
    %v2478 = vld [vmem:[#allocation11 + $0xc0] sm:$0xf]
    %v2479 = vld [vmem:[#allocation11 + $0xc4] sm:$0xf]
    %v2480 = vld [vmem:[#allocation11 + $0xc8] sm:$0xf]
    %v2481 = vld [vmem:[#allocation11 + $0xcc] sm:$0xf]
    %v2482 = vld [vmem:[#allocation11 + $0xd0] sm:$0xf]
    %v2483 = vld [vmem:[#allocation11 + $0xd4] sm:$0xf]
    %v2484 = vld [vmem:[#allocation11 + $0xd8] sm:$0xf]
    %v2485 = vld [vmem:[#allocation11 + $0xdc] sm:$0xf]
    %v2486 = vld [vmem:[#allocation11 + $0xe0] sm:$0xf]
    %v2487 = vld [vmem:[#allocation11 + $0xe4] sm:$0xf]
    %v2488 = vld [vmem:[#allocation11 + $0xe8] sm:$0xf]
    %v2489 = vld [vmem:[#allocation11 + $0xec] sm:$0xf]
    %v2490 = vld [vmem:[#allocation11 + $0xf0] sm:$0xf]
    %v2491 = vld [vmem:[#allocation11 + $0xf4] sm:$0xf]
    %v2492 = vld [vmem:[#allocation11 + $0xf8] sm:$0xf]
    %v2493 = vld [vmem:[#allocation11 + $0xfc] sm:$0xf]
    %v2494 = vld [vmem:[%s8] sm:$0x1]
    %v2496 = vlaneseq
    %v2497 = vshrl.u32 %v2496, 7
    %v2498 = vsub.s32 0, %v2497
    %v2499 = vrot.slane %v2494, %v2498
    %v2565 = vunpack.c.l.b16 %v2430
    %v2566 = vunpack.c.l.b16 %v2431
    %v2567 = vunpack.c.l.b16 %v2432
    %v2568 = vunpack.c.l.b16 %v2433
    %v2569 = vunpack.c.l.b16 %v2434
    %v2570 = vunpack.c.l.b16 %v2435
    %v2571 = vunpack.c.l.b16 %v2436
    %v2572 = vunpack.c.l.b16 %v2437
    %v2573 = vunpack.c.l.b16 %v2438
    %v2574 = vunpack.c.l.b16 %v2439
    %v2575 = vunpack.c.l.b16 %v2440
    %v2576 = vunpack.c.l.b16 %v2441
    %v2577 = vunpack.c.l.b16 %v2442
    %v2578 = vunpack.c.l.b16 %v2443
    %v2579 = vunpack.c.l.b16 %v2444
    %v2580 = vunpack.c.l.b16 %v2445
    %v2581 = vunpack.c.l.b16 %v2446
    %v2582 = vunpack.c.l.b16 %v2447
    %v2583 = vunpack.c.l.b16 %v2448
    %v2584 = vunpack.c.l.b16 %v2449
    %v2585 = vunpack.c.l.b16 %v2450
    %v2586 = vunpack.c.l.b16 %v2451
    %v2587 = vunpack.c.l.b16 %v2452
    %v2588 = vunpack.c.l.b16 %v2453
    %v2589 = vunpack.c.l.b16 %v2454
    %v2590 = vunpack.c.l.b16 %v2455
    %v2591 = vunpack.c.l.b16 %v2456
    %v2592 = vunpack.c.l.b16 %v2457
    %v2593 = vunpack.c.l.b16 %v2458
    %v2594 = vunpack.c.l.b16 %v2459
    %v2595 = vunpack.c.l.b16 %v2460
    %v2596 = vunpack.c.l.b16 %v2461
    %v2597 = vunpack.c.l.b16 %v2462
    %v2598 = vunpack.c.l.b16 %v2463
    %v2599 = vunpack.c.l.b16 %v2464
    %v2600 = vunpack.c.l.b16 %v2465
    %v2601 = vunpack.c.l.b16 %v2466
    %v2602 = vunpack.c.l.b16 %v2467
    %v2603 = vunpack.c.l.b16 %v2468
    %v2604 = vunpack.c.l.b16 %v2469
    %v2605 = vunpack.c.l.b16 %v2470
    %v2606 = vunpack.c.l.b16 %v2471
    %v2607 = vunpack.c.l.b16 %v2472
    %v2608 = vunpack.c.l.b16 %v2473
    %v2609 = vunpack.c.l.b16 %v2474
    %v2610 = vunpack.c.l.b16 %v2475
    %v2611 = vunpack.c.l.b16 %v2476
    %v2612 = vunpack.c.l.b16 %v2477
    %v2613 = vunpack.c.l.b16 %v2478
    %v2614 = vunpack.c.l.b16 %v2479
    %v2615 = vunpack.c.l.b16 %v2480
    %v2616 = vunpack.c.l.b16 %v2481
    %v2617 = vunpack.c.l.b16 %v2482
    %v2618 = vunpack.c.l.b16 %v2483
    %v2619 = vunpack.c.l.b16 %v2484
    %v2620 = vunpack.c.l.b16 %v2485
    %v2621 = vunpack.c.l.b16 %v2486
    %v2622 = vunpack.c.l.b16 %v2487
    %v2623 = vunpack.c.l.b16 %v2488
    %v2624 = vunpack.c.l.b16 %v2489
    %v2625 = vunpack.c.l.b16 %v2490
    %v2626 = vunpack.c.l.b16 %v2491
    %v2627 = vunpack.c.l.b16 %v2492
    %v2628 = vunpack.c.l.b16 %v2493
    %v2629 = vpack.c.b16 %v2566, %v2565
    %v2630 = vpack.c.b16 %v2568, %v2567
    %v2631 = vpack.c.b16 %v2570, %v2569
    %v2632 = vpack.c.b16 %v2572, %v2571
    %v2633 = vpack.c.b16 %v2574, %v2573
    %v2634 = vpack.c.b16 %v2576, %v2575
    %v2635 = vpack.c.b16 %v2578, %v2577
    %v2636 = vpack.c.b16 %v2580, %v2579
    %v2637 = vpack.c.b16 %v2582, %v2581
    %v2638 = vpack.c.b16 %v2584, %v2583
    %v2639 = vpack.c.b16 %v2586, %v2585
    %v2640 = vpack.c.b16 %v2588, %v2587
    %v2641 = vpack.c.b16 %v2590, %v2589
    %v2642 = vpack.c.b16 %v2592, %v2591
    %v2643 = vpack.c.b16 %v2594, %v2593
    %v2644 = vpack.c.b16 %v2596, %v2595
    %v2645 = vpack.c.b16 %v2598, %v2597
    %v2646 = vpack.c.b16 %v2600, %v2599
    %v2647 = vpack.c.b16 %v2602, %v2601
    %v2648 = vpack.c.b16 %v2604, %v2603
    %v2649 = vpack.c.b16 %v2606, %v2605
    %v2650 = vpack.c.b16 %v2608, %v2607
    %v2651 = vpack.c.b16 %v2610, %v2609
    %v2652 = vpack.c.b16 %v2612, %v2611
    %v2653 = vpack.c.b16 %v2614, %v2613
    %v2654 = vpack.c.b16 %v2616, %v2615
    %v2655 = vpack.c.b16 %v2618, %v2617
    %v2656 = vpack.c.b16 %v2620, %v2619
    %v2657 = vpack.c.b16 %v2622, %v2621
    %v2658 = vpack.c.b16 %v2624, %v2623
    %v2659 = vpack.c.b16 %v2626, %v2625
    %v2660 = vpack.c.b16 %v2628, %v2627
    %2693 = vmatprep.subr.bf16.mxu0 0
    %2694 = vmatpush1.bf16.msra.mxu0 %v2636
    %2695 = vmatprep.subr.bf16.mxu0 0
    %2696 = vmatpush1.bf16.msra.mxu0 %v2635
    %2697 = vmatprep.subr.bf16.mxu0 0
    %2698 = vmatpush1.bf16.msra.mxu0 %v2634
    %2699 = vmatprep.subr.bf16.mxu0 0
    %2700 = vmatpush1.bf16.msra.mxu0 %v2633
    %2701 = vmatprep.subr.bf16.mxu0 0
    %2702 = vmatpush1.bf16.msra.mxu0 %v2632
    %2703 = vmatprep.subr.bf16.mxu0 0
    %2704 = vmatpush1.bf16.msra.mxu0 %v2631
    %2705 = vmatprep.subr.bf16.mxu0 0
    %2706 = vmatpush1.bf16.msra.mxu0 %v2630
    %2707 = vmatprep.subr.bf16.mxu0 0
    %2708 = vmatpush1.bf16.msra.mxu0 %v2629
    %2709 = vmatprep.subr.bf16.mxu0 0
    %2710 = vmatpush2.bf16.msra.mxu0 %v2644
    %2711 = vmatprep.subr.bf16.mxu0 0
    %2712 = vmatpush2.bf16.msra.mxu0 %v2643
    %2713 = vmatprep.subr.bf16.mxu0 0
    %2714 = vmatpush2.bf16.msra.mxu0 %v2642
    %2715 = vmatprep.subr.bf16.mxu0 0
    %2716 = vmatpush2.bf16.msra.mxu0 %v2641
    %2717 = vmatprep.subr.bf16.mxu0 0
    %2718 = vmatpush2.bf16.msra.mxu0 %v2640
    %2719 = vmatprep.subr.bf16.mxu0 0
    %2720 = vmatpush2.bf16.msra.mxu0 %v2639
    %2721 = vmatprep.subr.bf16.mxu0 0
    %2722 = vmatpush2.bf16.msra.mxu0 %v2638
    %2723 = vmatprep.subr.bf16.mxu0 0
    %2724 = vmatpush2.bf16.msra.mxu0 %v2637
    %2725 = vmatprep.mubr.bf16.mxu0 %v2427
    %2726 = vmatmul.mubr.bf16.gmra.mxu0 %v2426
    %v2727 = vpop.f32.mrf.mxu0
    %v2728 = vadd.f32 %v2499, %v2727
    %v2729 = vpop.f32.mrf.mxu0
    %v2730 = vpop.f32.mrf.mxu0
    %v2731 = vadd.f32 %v2499, %v2730
    %v2732 = vpop.f32.mrf.mxu0
    %2733 = vdwg.mxu0
    %2734 = vmatprep.subr.bf16.mxu0 0
    %2735 = vmatpush1.bf16.msra.mxu0 %v2652
    %2736 = vmatprep.subr.bf16.mxu0 0
    %2737 = vmatpush1.bf16.msra.mxu0 %v2651
    %2738 = vmatprep.subr.bf16.mxu0 0
    %2739 = vmatpush1.bf16.msra.mxu0 %v2650
    %2740 = vmatprep.subr.bf16.mxu0 0
    %2741 = vmatpush1.bf16.msra.mxu0 %v2649
    %2742 = vmatprep.subr.bf16.mxu0 0
    %2743 = vmatpush1.bf16.msra.mxu0 %v2648
    %2744 = vmatprep.subr.bf16.mxu0 0
    %2745 = vmatpush1.bf16.msra.mxu0 %v2647
    %2746 = vmatprep.subr.bf16.mxu0 0
    %2747 = vmatpush1.bf16.msra.mxu0 %v2646
    %2748 = vmatprep.subr.bf16.mxu0 0
    %2749 = vmatpush1.bf16.msra.mxu0 %v2645
    %2750 = vmatprep.subr.bf16.mxu0 0
    %2751 = vmatpush2.bf16.msra.mxu0 %v2660
    %2752 = vmatprep.subr.bf16.mxu0 0
    %2753 = vmatpush2.bf16.msra.mxu0 %v2659
    %2754 = vmatprep.subr.bf16.mxu0 0
    %2755 = vmatpush2.bf16.msra.mxu0 %v2658
    %2756 = vmatprep.subr.bf16.mxu0 0
    %2757 = vmatpush2.bf16.msra.mxu0 %v2657
    %2758 = vmatprep.subr.bf16.mxu0 0
    %2759 = vmatpush2.bf16.msra.mxu0 %v2656
    %2760 = vmatprep.subr.bf16.mxu0 0
    %2761 = vmatpush2.bf16.msra.mxu0 %v2655
    %2762 = vmatprep.subr.bf16.mxu0 0
    %2763 = vmatpush2.bf16.msra.mxu0 %v2654
    %2764 = vmatprep.subr.bf16.mxu0 0
    %2765 = vmatpush2.bf16.msra.mxu0 %v2653
    %2766 = vmatprep.mubr.bf16.mxu0 %v2429
    %2767 = vmatmul.mubr.bf16.gmra.mxu0 %v2428
    %v2768 = vpop.f32.mrf.mxu0
    %v2769 = vadd.f32 %v2728, %v2768
    %v2770 = vpop.f32.mrf.mxu0
    %v2771 = vpop.f32.mrf.mxu0
    %v2772 = vadd.f32 %v2731, %v2771
    %v2773 = vpop.f32.mrf.mxu0
    %2774 = vdwg.mxu0
    %2775 = vst [vmem:[#allocation13] sm:$0xff] %v2769
    %2776 = vst [vmem:[#allocation13 + $0x8] sm:$0xff] %v2772
    // Predicated region
    $region62: #{tpu_custom_call.1} parent=1 // pred_check
      _
    $region63: #{tpu_custom_call.1} parent=1 // pred_check_branch
      %2778 = sbr.rel (0) target = $region65
    $region64: #{tpu_custom_call.1} parent=1 // pred_region
      %s2780 = ssub.s32 256, 256
      %2781 = vsyncadd [#allocation4], %s2780
      %s2782 = sshll.u32 [#allocation13], 4
      %s2783 = int_to_ptr.vmem [resolvable:$true] %s2782
      %2788 = dma.vmem_to_hbm [thread:$0]  %s2783, 256, %s9, [#allocation4], 128, 128, 8
    $region65: #{tpu_custom_call.1} parent=1 // pred_fallthru
      _
    // Predicated region
    $region66: #{tpu_custom_call.1} parent=1 // pred_check
      _
    $region67: #{tpu_custom_call.1} parent=1 // pred_check_branch
      %2790 = sbr.rel (0) target = $region69
    $region68: #{tpu_custom_call.1} parent=1 // pred_region
      %2791 = dma.done [#allocation4], 256
    $region69: #{tpu_custom_call.1} parent=1 // pred_fallthru
      _
    %2792 = vsyncpa [#allocation3], 1
    %2793 = vsyncpa [#allocation6], 1
    %2794 = vsyncpa [#allocation9], 1
    %2795 = vsyncpa [#allocation12], 1
    %2796 = vsyncpa [#allocation4], 1

</llo_original>
